<compile_context>
chip_gen: v5e
topology: v5e:2x2
jax: 0.10.0
libtpu: 0.0.40
codegen_flags: <defaults>
</compile_context>

<pallas_src>
import math
import functools

import jax
import jax.numpy as jnp
from jax.experimental import pallas as pl
from jax.experimental.pallas import tpu as pltpu


# ----------------------------- in-kernel helpers -----------------------------

def _layer_norm(x, w, b, eps=1e-5):
    mu = jnp.mean(x, axis=-1, keepdims=True)
    var = jnp.mean((x - mu) ** 2, axis=-1, keepdims=True)
    return (x - mu) * jax.lax.rsqrt(var + eps) * w + b


_SQRT_HALF = 1.0 / math.sqrt(2.0)


def _erf_poly(z):
    # Abramowitz & Stegun 7.1.26, |error| < 1.5e-7.  Uses only exp / mul / add /
    # where so it is guaranteed to lower in Mosaic.
    a1, a2, a3, a4, a5 = (0.254829592, -0.284496736, 1.421413741,
                          -1.453152027, 1.061405429)
    p = 0.3275911
    az = jnp.abs(z)
    t = 1.0 / (1.0 + p * az)
    poly = ((((a5 * t + a4) * t + a3) * t + a2) * t + a1) * t
    y = 1.0 - poly * jnp.exp(-az * az)
    return jnp.where(z < 0.0, -y, y)


def _gelu_exact(x):
    return 0.5 * x * (1.0 + _erf_poly(x * _SQRT_HALF))


# ------------------------------ fused Pallas kernel ---------------------------

def _fused_transformer_kernel(x_ref, mask_ref, pe_ref, wqkv_ref, wo_ref,
                              w1_ref, b1_ref, w2_ref, vecd_ref, lnf_ref,
                              o_ref, ctx_ref, *, nhead, depth):
    """Whole forward pass for one batch element (grid axis = batch)."""
    T, D = x_ref.shape[1], x_ref.shape[2]
    dh = D // nhead
    scale = 1.0 / math.sqrt(dh)

    # mask multiply + positional embedding (fp32 compute throughout)
    x = (x_ref[0].astype(jnp.float32) * mask_ref[0].astype(jnp.float32)
         + pe_ref[...].astype(jnp.float32))                         # (T, D)

    # TODO(synk): for large depth move this to a grid axis / fori_loop with
    # streamed bf16 weights instead of a static unroll.
    for l in range(depth):
        vec = vecd_ref[l]          # (9, D): bq, bk, bv, bo, b2, ln1w, ln1b, ln2w, ln2b

        # ---- fused, lane-dense QKV projection: one (T,D)@(D,3D) matmul ----
        qkv = jnp.dot(x, wqkv_ref[l], preferred_element_type=jnp.float32)  # (T, 3D)
        q = qkv[:, 0:D] + vec[0:1]
        k = qkv[:, D:2 * D] + vec[1:2]
        v = qkv[:, 2 * D:3 * D] + vec[2:3]

        # ---- per-head score / exact softmax / ctx (only inherently per-head
        #      step; dh-wide lane slices, results written lane-dense to scratch)
        for h in range(nhead):
            sl = slice(h * dh, (h + 1) * dh)
            qh, kh, vh = q[:, sl], k[:, sl], v[:, sl]                 # (T, dh)
            s = jax.lax.dot_general(qh, kh, (((1,), (1,)), ((), ())),
                                    preferred_element_type=jnp.float32) * scale
            s = s - jnp.max(s, axis=-1, keepdims=True)
            p = jnp.exp(s)
            p = p / jnp.sum(p, axis=-1, keepdims=True)                # exact softmax
            ctx_ref[:, sl] = jnp.dot(p, vh, preferred_element_type=jnp.float32)

        # ---- fused out-projection: one K=D contraction ----
        attn = jnp.dot(ctx_ref[...], wo_ref[l],
                       preferred_element_type=jnp.float32) + vec[3:4]

        # residual + norm1 (dropout = identity)
        x1 = _layer_norm(x + attn, vec[5:6], vec[6:7])

        # ---- feed-forward: linear1 -> exact gelu -> linear2 ----
        h1 = jnp.dot(x1, w1_ref[l], preferred_element_type=jnp.float32) + b1_ref[l]
        h1 = _gelu_exact(h1)
        ff = jnp.dot(h1, w2_ref[l], preferred_element_type=jnp.float32) + vec[4:5]

        # residual + norm2
        x = _layer_norm(x1 + ff, vec[7:8], vec[8:9])

    # final LayerNorm
    lnf = lnf_ref[...]                                                # (2, D)
    o_ref[0] = _layer_norm(x, lnf[0:1], lnf[1:2]).astype(o_ref.dtype)


# ------------------------------- packing / wrapper ----------------------------

def pack_params(params, nhead):
    """Pack once at init: stack per-layer weights over depth, pre-transposed so
    the kernel only does lane-dense jnp.dot (no in-kernel transposes)."""
    del nhead  # heads stay folded into lanes; no per-head weight layout needed
    layers = params["layers"]
    D = layers[0]["wo"].shape[0]
    dff = layers[0]["w1"].shape[0]

    def one(lp):
        vecd = jnp.concatenate([
            lp["bqkv"].reshape(3, D),                                  # bq, bk, bv
            jnp.stack([lp["bo"], lp["b2"], lp["ln1w"], lp["ln1b"],
                       lp["ln2w"], lp["ln2b"]], axis=0),               # bo..ln2b
        ], axis=0)                                                     # (9, D)
        return dict(wqkv=lp["wqkv"].T,          # (D, 3D)  qkv = x @ wqkv
                    wo=lp["wo"].T,              # (D, D)   attn = ctx @ wo
                    w1=lp["w1"].T,              # (D, dff)
                    b1=lp["b1"].reshape(1, dff),
                    w2=lp["w2"].T,              # (dff, D)
                    vecd=vecd)

    per = [one(lp) for lp in layers]
    packed = {key: jnp.stack([p[key] for p in per], axis=0) for key in per[0]}
    packed["lnf"] = jnp.stack([params["ln_w"], params["ln_b"]], axis=0)  # (2, D)
    return packed


def transformer_forward(x, packed, pe, nhead, mask=None):
    """Matches transformer.forward: mask-mul, +PE, encoder stack, final LN."""
    B, T, D = x.shape
    depth = packed["wqkv"].shape[0]
    dff = packed["w1"].shape[2]

    if mask is None:
        mask3 = jnp.ones((B, T, 1), x.dtype)
    else:
        mask3 = mask.astype(x.dtype)[..., None]

    def full(shape):
        return pl.BlockSpec(shape, lambda b, _n=len(shape): (0,) * _n)

    kernel = functools.partial(_fused_transformer_kernel, nhead=nhead, depth=depth)
    return pl.pallas_call(
        kernel,
        out_shape=jax.ShapeDtypeStruct((B, T, D), x.dtype),
        grid=(B,),
        in_specs=[
            pl.BlockSpec((1, T, D), lambda b: (b, 0, 0)),   # x, one batch element / step
            pl.BlockSpec((1, T, 1), lambda b: (b, 0, 0)),   # mask (pre-expanded)
            full((T, D)),                                   # positional embedding
            full((depth, D, 3 * D)),                        # fused qkv weights (x @ W)
            full((depth, D, D)),                            # out-proj weights (ctx @ W)
            full((depth, D, dff)),                          # linear1 (in, out)
            full((depth, 1, dff)),                          # linear1 bias
            full((depth, dff, D)),                          # linear2 (in, out)
            full((depth, 9, D)),                            # bq,bk,bv,bo,b2,ln1w,ln1b,ln2w,ln2b
            full((2, D)),                                   # final LN w, b
        ],
        out_specs=pl.BlockSpec((1, T, D), lambda b: (b, 0, 0)),
        scratch_shapes=[pltpu.VMEM((T, D), jnp.float32)],   # lane-dense ctx buffer
        compiler_params=pltpu.CompilerParams(dimension_semantics=("parallel",)),
    )(x, mask3, pe, packed["wqkv"], packed["wo"], packed["w1"],
      packed["b1"], packed["w2"], packed["vecd"], packed["lnf"])


def build_sincos_pe(n_frame, d_model):
    pos = jnp.arange(n_frame, dtype=jnp.float32)
    cols = []
    for i in range(d_model):
        t = math.pow(10000.0, i / d_model)
        cols.append(jnp.sin(pos / t) if i % 2 == 0 else jnp.cos(pos / t))
    return jnp.stack(cols, axis=1)                          # (n_frame, d_model)


# --------------------------- pure-JAX reference -------------------------------

def _ref_forward(x, params, pe, nhead, mask=None):
    if mask is not None:
        x = x * mask[..., None]
    x = x + pe
    for lp in params["layers"]:
        B, T, D = x.shape
        dh = D // nhead
        qkv = x @ lp["wqkv"].T + lp["bqkv"]
        q, k, v = jnp.split(qkv, 3, axis=-1)
        q = q.reshape(B, T, nhead, dh).transpose(0, 2, 1, 3)
        k = k.reshape(B, T, nhead, dh).transpose(0, 2, 1, 3)
        v = v.reshape(B, T, nhead, dh).transpose(0, 2, 1, 3)
        s = jnp.einsum("bhtd,bhsd->bhts", q, k) / math.sqrt(dh)
        p = jax.nn.softmax(s, axis=-1)
        ctx = jnp.einsum("bhts,bhsd->bhtd", p, v).transpose(0, 2, 1, 3).reshape(B, T, D)
        attn = ctx @ lp["wo"].T + lp["bo"]
        x1 = _layer_norm(x + attn, lp["ln1w"], lp["ln1b"])
        ff = jax.nn.gelu(x1 @ lp["w1"].T + lp["b1"], approximate=False) @ lp["w2"].T + lp["b2"]
        x = _layer_norm(x1 + ff, lp["ln2w"], lp["ln2b"])
    return _layer_norm(x, params["ln_w"], params["ln_b"])


# ----------------------------------- main -------------------------------------

def init_params(key, depth, d_model, dff):
    layers = []
    for _ in range(depth):
        ks = jax.random.split(key, 9)
        key = ks[0]
        layers.append(dict(
            wqkv=0.1 * jax.random.normal(ks[1], (3 * d_model, d_model), jnp.float32),
            bqkv=0.1 * jax.random.normal(ks[2], (3 * d_model,), jnp.float32),
            wo=0.1 * jax.random.normal(ks[3], (d_model, d_model), jnp.float32),
            bo=0.1 * jax.random.normal(ks[4], (d_model,), jnp.float32),
            w1=0.1 * jax.random.normal(ks[5], (dff, d_model), jnp.float32),
            b1=0.1 * jax.random.normal(ks[6], (dff,), jnp.float32),
            w2=0.1 * jax.random.normal(ks[7], (d_model, dff), jnp.float32),
            b2=0.1 * jax.random.normal(ks[8], (d_model,), jnp.float32),
            ln1w=jnp.ones((d_model,), jnp.float32), ln1b=jnp.zeros((d_model,), jnp.float32),
            ln2w=jnp.ones((d_model,), jnp.float32), ln2b=jnp.zeros((d_model,), jnp.float32),
        ))
    return dict(layers=layers,
                ln_w=jnp.ones((d_model,), jnp.float32),
                ln_b=jnp.zeros((d_model,), jnp.float32))


if __name__ == "__main__":
    # config: d_model=32, nhead=4, dff=64, depth=2, dropout=0 (inference), pe_type='sin-cos'
    B, T, D, H, DFF, DEPTH = 2, 8, 32, 4, 64, 2

    key = jax.random.PRNGKey(0)
    kx, kp = jax.random.split(key)
    x = jax.random.normal(kx, (B, T, D), jnp.float32)
    params = init_params(kp, DEPTH, D, DFF)
    packed = pack_params(params, H)          # packed once, outside the call path
    pe = build_sincos_pe(T, D)

    mask = jnp.ones((B, T), jnp.float32).at[1, -2:].set(0.0)

    out = transformer_forward(x, packed, pe, H, mask=mask)
    out = jax.block_until_ready(out)

    ref = _ref_forward(x, params, pe, H, mask=mask)
    assert out.shape == (B, T, D)
    assert jnp.allclose(out, ref, atol=1e-3, rtol=1e-3), "mismatch vs pure-JAX reference"

    print("KERNEL_OK")
</pallas_src>

<mosaic_0001>
module attributes {stable_mosaic.version = 11 : i64} {
  func.func @_fused_transformer_kernel(%arg0: i32, %arg1: memref<1x8x32xf32, #tpu.memory_space<vmem>>, %arg2: memref<1x8x1xf32, #tpu.memory_space<vmem>>, %arg3: memref<8x32xf32, #tpu.memory_space<vmem>>, %arg4: memref<2x32x96xf32, #tpu.memory_space<vmem>>, %arg5: memref<2x32x32xf32, #tpu.memory_space<vmem>>, %arg6: memref<2x32x64xf32, #tpu.memory_space<vmem>>, %arg7: memref<2x1x64xf32, #tpu.memory_space<vmem>>, %arg8: memref<2x64x32xf32, #tpu.memory_space<vmem>>, %arg9: memref<2x9x32xf32, #tpu.memory_space<vmem>>, %arg10: memref<2x32xf32, #tpu.memory_space<vmem>>, %arg11: memref<1x8x32xf32, #tpu.memory_space<vmem>>, %arg12: memref<8x32xf32, #tpu.memory_space<vmem>>) attributes {dimension_semantics = [#tpu.dimension_semantics<parallel>], iteration_bounds = array<i64: 2>, scalar_prefetch = 0 : i64, scratch_operands = 1 : i64, tpu.core_type = #tpu.core_type<tc>, window_params = [{transform_indices = @transform_0, window_bounds = array<i64: 1, 8, 32>}, {transform_indices = @transform_1, window_bounds = array<i64: 1, 8, 1>}, {pipeline_mode = #tpu.pipeline_mode<synchronous>, transform_indices = @transform_2, window_bounds = array<i64: 8, 32>}, {pipeline_mode = #tpu.pipeline_mode<synchronous>, transform_indices = @transform_3, window_bounds = array<i64: 2, 32, 96>}, {pipeline_mode = #tpu.pipeline_mode<synchronous>, transform_indices = @transform_4, window_bounds = array<i64: 2, 32, 32>}, {pipeline_mode = #tpu.pipeline_mode<synchronous>, transform_indices = @transform_5, window_bounds = array<i64: 2, 32, 64>}, {pipeline_mode = #tpu.pipeline_mode<synchronous>, transform_indices = @transform_6, window_bounds = array<i64: 2, 1, 64>}, {pipeline_mode = #tpu.pipeline_mode<synchronous>, transform_indices = @transform_7, window_bounds = array<i64: 2, 64, 32>}, {pipeline_mode = #tpu.pipeline_mode<synchronous>, transform_indices = @transform_8, window_bounds = array<i64: 2, 9, 32>}, {pipeline_mode = #tpu.pipeline_mode<synchronous>, transform_indices = @transform_9, window_bounds = array<i64: 2, 32>}, {transform_indices = @transform_10, window_bounds = array<i64: 1, 8, 32>}]} {
    %c0 = arith.constant 0 : index
    %c0_0 = arith.constant 0 : index
    %c0_1 = arith.constant 0 : index
    %0 = vector.load %arg1[%c0, %c0_0, %c0_1] : memref<1x8x32xf32, #tpu.memory_space<vmem>>, vector<1x8x32xf32>
    %1 = vector.shape_cast %0 : vector<1x8x32xf32> to vector<8x32xf32>
    %c0_2 = arith.constant 0 : index
    %c0_3 = arith.constant 0 : index
    %c0_4 = arith.constant 0 : index
    %2 = vector.load %arg2[%c0_2, %c0_3, %c0_4] : memref<1x8x1xf32, #tpu.memory_space<vmem>>, vector<1x8x1xf32>
    %3 = vector.shape_cast %2 : vector<1x8x1xf32> to vector<8x1xf32>
    %4 = vector.broadcast %3 : vector<8x1xf32> to vector<8x32xf32>
    %5 = arith.mulf %1, %4 : vector<8x32xf32>
    %c0_5 = arith.constant 0 : index
    %c0_6 = arith.constant 0 : index
    %6 = vector.load %arg3[%c0_5, %c0_6] : memref<8x32xf32, #tpu.memory_space<vmem>>, vector<8x32xf32>
    %7 = arith.addf %5, %6 : vector<8x32xf32>
    %c0_7 = arith.constant 0 : index
    %c0_8 = arith.constant 0 : index
    %c0_9 = arith.constant 0 : index
    %8 = vector.load %arg9[%c0_7, %c0_8, %c0_9] : memref<2x9x32xf32, #tpu.memory_space<vmem>>, vector<1x9x32xf32>
    %9 = vector.shape_cast %8 : vector<1x9x32xf32> to vector<9x32xf32>
    %c0_10 = arith.constant 0 : index
    %c0_11 = arith.constant 0 : index
    %c0_12 = arith.constant 0 : index
    %10 = vector.load %arg4[%c0_10, %c0_11, %c0_12] : memref<2x32x96xf32, #tpu.memory_space<vmem>>, vector<1x32x96xf32>
    %11 = vector.shape_cast %10 : vector<1x32x96xf32> to vector<32x96xf32>
    %cst = arith.constant dense<0.000000e+00> : vector<8x96xf32>
    %12 = tpu.matmul %7, %11, %cst {dimension_numbers = #tpu.dot_dimension_numbers<[1], [0], [0], [1], [0, 0, 1, 1], [], []>} : vector<8x32xf32>, vector<32x96xf32>, vector<8x96xf32> -> vector<8x96xf32>
    %13 = vector.extract_strided_slice %12 {offsets = [0, 0], sizes = [8, 32], strides = [1, 1]} : vector<8x96xf32> to vector<8x32xf32>
    %14 = vector.extract_strided_slice %9 {offsets = [0, 0], sizes = [1, 32], strides = [1, 1]} : vector<9x32xf32> to vector<1x32xf32>
    %15 = vector.broadcast %14 : vector<1x32xf32> to vector<8x32xf32>
    %16 = arith.addf %13, %15 : vector<8x32xf32>
    %17 = vector.extract_strided_slice %12 {offsets = [0, 32], sizes = [8, 32], strides = [1, 1]} : vector<8x96xf32> to vector<8x32xf32>
    %18 = vector.extract_strided_slice %9 {offsets = [1, 0], sizes = [1, 32], strides = [1, 1]} : vector<9x32xf32> to vector<1x32xf32>
    %19 = vector.broadcast %18 : vector<1x32xf32> to vector<8x32xf32>
    %20 = arith.addf %17, %19 : vector<8x32xf32>
    %21 = vector.extract_strided_slice %12 {offsets = [0, 64], sizes = [8, 32], strides = [1, 1]} : vector<8x96xf32> to vector<8x32xf32>
    %22 = vector.extract_strided_slice %9 {offsets = [2, 0], sizes = [1, 32], strides = [1, 1]} : vector<9x32xf32> to vector<1x32xf32>
    %23 = vector.broadcast %22 : vector<1x32xf32> to vector<8x32xf32>
    %24 = arith.addf %21, %23 : vector<8x32xf32>
    %25 = vector.extract_strided_slice %16 {offsets = [0, 0], sizes = [8, 8], strides = [1, 1]} : vector<8x32xf32> to vector<8x8xf32>
    %26 = vector.extract_strided_slice %20 {offsets = [0, 0], sizes = [8, 8], strides = [1, 1]} : vector<8x32xf32> to vector<8x8xf32>
    %27 = vector.extract_strided_slice %24 {offsets = [0, 0], sizes = [8, 8], strides = [1, 1]} : vector<8x32xf32> to vector<8x8xf32>
    %cst_13 = arith.constant dense<0.000000e+00> : vector<8x8xf32>
    %28 = tpu.matmul %25, %26, %cst_13 {dimension_numbers = #tpu.dot_dimension_numbers<[1], [1], [0], [0], [0, 0, 1, 0], [], []>} : vector<8x8xf32>, vector<8x8xf32>, vector<8x8xf32> -> vector<8x8xf32>
    %cst_14 = arith.constant 0.353553385 : f32
    %29 = vector.broadcast %cst_14 : f32 to vector<8x8xf32>
    %30 = arith.mulf %28, %29 : vector<8x8xf32>
    %cst_15 = arith.constant dense<0xFF800000> : vector<8xf32>
    %31 = vector.multi_reduction <maximumf>, %30, %cst_15 [1] : vector<8x8xf32> to vector<8xf32>
    %32 = vector.shape_cast %31 : vector<8xf32> to vector<8x1xf32>
    %33 = vector.broadcast %32 : vector<8x1xf32> to vector<8x8xf32>
    %34 = arith.subf %30, %33 : vector<8x8xf32>
    %35 = math.exp %34 : vector<8x8xf32>
    %cst_16 = arith.constant dense<0.000000e+00> : vector<8xf32>
    %36 = vector.multi_reduction <add>, %35, %cst_16 [1] : vector<8x8xf32> to vector<8xf32>
    %37 = vector.shape_cast %36 : vector<8xf32> to vector<8x1xf32>
    %38 = vector.broadcast %37 : vector<8x1xf32> to vector<8x8xf32>
    %39 = arith.divf %35, %38 : vector<8x8xf32>
    %cst_17 = arith.constant dense<0.000000e+00> : vector<8x8xf32>
    %40 = tpu.matmul %39, %27, %cst_17 {dimension_numbers = #tpu.dot_dimension_numbers<[1], [0], [0], [1], [0, 0, 1, 1], [], []>} : vector<8x8xf32>, vector<8x8xf32>, vector<8x8xf32> -> vector<8x8xf32>
    %c0_18 = arith.constant 0 : index
    %c0_19 = arith.constant 0 : index
    %41 = vector.load %arg12[%c0_18, %c0_19] : memref<8x32xf32, #tpu.memory_space<vmem>>, vector<8x8xf32>
    tpu.vector_store %arg12[%c0_18, %c0_19], %40 {strides = array<i32>} : memref<8x32xf32, #tpu.memory_space<vmem>>, vector<8x8xf32>,
    %42 = vector.extract_strided_slice %16 {offsets = [0, 8], sizes = [8, 8], strides = [1, 1]} : vector<8x32xf32> to vector<8x8xf32>
    %43 = vector.extract_strided_slice %20 {offsets = [0, 8], sizes = [8, 8], strides = [1, 1]} : vector<8x32xf32> to vector<8x8xf32>
    %44 = vector.extract_strided_slice %24 {offsets = [0, 8], sizes = [8, 8], strides = [1, 1]} : vector<8x32xf32> to vector<8x8xf32>
    %cst_20 = arith.constant dense<0.000000e+00> : vector<8x8xf32>
    %45 = tpu.matmul %42, %43, %cst_20 {dimension_numbers = #tpu.dot_dimension_numbers<[1], [1], [0], [0], [0, 0, 1, 0], [], []>} : vector<8x8xf32>, vector<8x8xf32>, vector<8x8xf32> -> vector<8x8xf32>
    %cst_21 = arith.constant 0.353553385 : f32
    %46 = vector.broadcast %cst_21 : f32 to vector<8x8xf32>
    %47 = arith.mulf %45, %46 : vector<8x8xf32>
    %cst_22 = arith.constant dense<0xFF800000> : vector<8xf32>
    %48 = vector.multi_reduction <maximumf>, %47, %cst_22 [1] : vector<8x8xf32> to vector<8xf32>
    %49 = vector.shape_cast %48 : vector<8xf32> to vector<8x1xf32>
    %50 = vector.broadcast %49 : vector<8x1xf32> to vector<8x8xf32>
    %51 = arith.subf %47, %50 : vector<8x8xf32>
    %52 = math.exp %51 : vector<8x8xf32>
    %cst_23 = arith.constant dense<0.000000e+00> : vector<8xf32>
    %53 = vector.multi_reduction <add>, %52, %cst_23 [1] : vector<8x8xf32> to vector<8xf32>
    %54 = vector.shape_cast %53 : vector<8xf32> to vector<8x1xf32>
    %55 = vector.broadcast %54 : vector<8x1xf32> to vector<8x8xf32>
    %56 = arith.divf %52, %55 : vector<8x8xf32>
    %cst_24 = arith.constant dense<0.000000e+00> : vector<8x8xf32>
    %57 = tpu.matmul %56, %44, %cst_24 {dimension_numbers = #tpu.dot_dimension_numbers<[1], [0], [0], [1], [0, 0, 1, 1], [], []>} : vector<8x8xf32>, vector<8x8xf32>, vector<8x8xf32> -> vector<8x8xf32>
    %c0_25 = arith.constant 0 : index
    %c8 = arith.constant 8 : index
    %58 = vector.load %arg12[%c0_25, %c8] : memref<8x32xf32, #tpu.memory_space<vmem>>, vector<8x8xf32>
    tpu.vector_store %arg12[%c0_25, %c8], %57 {strides = array<i32>} : memref<8x32xf32, #tpu.memory_space<vmem>>, vector<8x8xf32>,
    %59 = vector.extract_strided_slice %16 {offsets = [0, 16], sizes = [8, 8], strides = [1, 1]} : vector<8x32xf32> to vector<8x8xf32>
    %60 = vector.extract_strided_slice %20 {offsets = [0, 16], sizes = [8, 8], strides = [1, 1]} : vector<8x32xf32> to vector<8x8xf32>
    %61 = vector.extract_strided_slice %24 {offsets = [0, 16], sizes = [8, 8], strides = [1, 1]} : vector<8x32xf32> to vector<8x8xf32>
    %cst_26 = arith.constant dense<0.000000e+00> : vector<8x8xf32>
    %62 = tpu.matmul %59, %60, %cst_26 {dimension_numbers = #tpu.dot_dimension_numbers<[1], [1], [0], [0], [0, 0, 1, 0], [], []>} : vector<8x8xf32>, vector<8x8xf32>, vector<8x8xf32> -> vector<8x8xf32>
    %cst_27 = arith.constant 0.353553385 : f32
    %63 = vector.broadcast %cst_27 : f32 to vector<8x8xf32>
    %64 = arith.mulf %62, %63 : vector<8x8xf32>
    %cst_28 = arith.constant dense<0xFF800000> : vector<8xf32>
    %65 = vector.multi_reduction <maximumf>, %64, %cst_28 [1] : vector<8x8xf32> to vector<8xf32>
    %66 = vector.shape_cast %65 : vector<8xf32> to vector<8x1xf32>
    %67 = vector.broadcast %66 : vector<8x1xf32> to vector<8x8xf32>
    %68 = arith.subf %64, %67 : vector<8x8xf32>
    %69 = math.exp %68 : vector<8x8xf32>
    %cst_29 = arith.constant dense<0.000000e+00> : vector<8xf32>
    %70 = vector.multi_reduction <add>, %69, %cst_29 [1] : vector<8x8xf32> to vector<8xf32>
    %71 = vector.shape_cast %70 : vector<8xf32> to vector<8x1xf32>
    %72 = vector.broadcast %71 : vector<8x1xf32> to vector<8x8xf32>
    %73 = arith.divf %69, %72 : vector<8x8xf32>
    %cst_30 = arith.constant dense<0.000000e+00> : vector<8x8xf32>
    %74 = tpu.matmul %73, %61, %cst_30 {dimension_numbers = #tpu.dot_dimension_numbers<[1], [0], [0], [1], [0, 0, 1, 1], [], []>} : vector<8x8xf32>, vector<8x8xf32>, vector<8x8xf32> -> vector<8x8xf32>
    %c0_31 = arith.constant 0 : index
    %c16 = arith.constant 16 : index
    %75 = vector.load %arg12[%c0_31, %c16] : memref<8x32xf32, #tpu.memory_space<vmem>>, vector<8x8xf32>
    tpu.vector_store %arg12[%c0_31, %c16], %74 {strides = array<i32>} : memref<8x32xf32, #tpu.memory_space<vmem>>, vector<8x8xf32>,
    %76 = vector.extract_strided_slice %16 {offsets = [0, 24], sizes = [8, 8], strides = [1, 1]} : vector<8x32xf32> to vector<8x8xf32>
    %77 = vector.extract_strided_slice %20 {offsets = [0, 24], sizes = [8, 8], strides = [1, 1]} : vector<8x32xf32> to vector<8x8xf32>
    %78 = vector.extract_strided_slice %24 {offsets = [0, 24], sizes = [8, 8], strides = [1, 1]} : vector<8x32xf32> to vector<8x8xf32>
    %cst_32 = arith.constant dense<0.000000e+00> : vector<8x8xf32>
    %79 = tpu.matmul %76, %77, %cst_32 {dimension_numbers = #tpu.dot_dimension_numbers<[1], [1], [0], [0], [0, 0, 1, 0], [], []>} : vector<8x8xf32>, vector<8x8xf32>, vector<8x8xf32> -> vector<8x8xf32>
    %cst_33 = arith.constant 0.353553385 : f32
    %80 = vector.broadcast %cst_33 : f32 to vector<8x8xf32>
    %81 = arith.mulf %79, %80 : vector<8x8xf32>
    %cst_34 = arith.constant dense<0xFF800000> : vector<8xf32>
    %82 = vector.multi_reduction <maximumf>, %81, %cst_34 [1] : vector<8x8xf32> to vector<8xf32>
    %83 = vector.shape_cast %82 : vector<8xf32> to vector<8x1xf32>
    %84 = vector.broadcast %83 : vector<8x1xf32> to vector<8x8xf32>
    %85 = arith.subf %81, %84 : vector<8x8xf32>
    %86 = math.exp %85 : vector<8x8xf32>
    %cst_35 = arith.constant dense<0.000000e+00> : vector<8xf32>
    %87 = vector.multi_reduction <add>, %86, %cst_35 [1] : vector<8x8xf32> to vector<8xf32>
    %88 = vector.shape_cast %87 : vector<8xf32> to vector<8x1xf32>
    %89 = vector.broadcast %88 : vector<8x1xf32> to vector<8x8xf32>
    %90 = arith.divf %86, %89 : vector<8x8xf32>
    %cst_36 = arith.constant dense<0.000000e+00> : vector<8x8xf32>
    %91 = tpu.matmul %90, %78, %cst_36 {dimension_numbers = #tpu.dot_dimension_numbers<[1], [0], [0], [1], [0, 0, 1, 1], [], []>} : vector<8x8xf32>, vector<8x8xf32>, vector<8x8xf32> -> vector<8x8xf32>
    %c0_37 = arith.constant 0 : index
    %c24 = arith.constant 24 : index
    %92 = vector.load %arg12[%c0_37, %c24] : memref<8x32xf32, #tpu.memory_space<vmem>>, vector<8x8xf32>
    tpu.vector_store %arg12[%c0_37, %c24], %91 {strides = array<i32>} : memref<8x32xf32, #tpu.memory_space<vmem>>, vector<8x8xf32>,
    %c0_38 = arith.constant 0 : index
    %c0_39 = arith.constant 0 : index
    %93 = vector.load %arg12[%c0_38, %c0_39] : memref<8x32xf32, #tpu.memory_space<vmem>>, vector<8x32xf32>
    %c0_40 = arith.constant 0 : index
    %c0_41 = arith.constant 0 : index
    %c0_42 = arith.constant 0 : index
    %94 = vector.load %arg5[%c0_40, %c0_41, %c0_42] : memref<2x32x32xf32, #tpu.memory_space<vmem>>, vector<1x32x32xf32>
    %95 = vector.shape_cast %94 : vector<1x32x32xf32> to vector<32x32xf32>
    %cst_43 = arith.constant dense<0.000000e+00> : vector<8x32xf32>
    %96 = tpu.matmul %93, %95, %cst_43 {dimension_numbers = #tpu.dot_dimension_numbers<[1], [0], [0], [1], [0, 0, 1, 1], [], []>} : vector<8x32xf32>, vector<32x32xf32>, vector<8x32xf32> -> vector<8x32xf32>
    %97 = vector.extract_strided_slice %9 {offsets = [3, 0], sizes = [1, 32], strides = [1, 1]} : vector<9x32xf32> to vector<1x32xf32>
    %98 = vector.broadcast %97 : vector<1x32xf32> to vector<8x32xf32>
    %99 = arith.addf %96, %98 : vector<8x32xf32>
    %100 = arith.addf %7, %99 : vector<8x32xf32>
    %101 = vector.extract_strided_slice %9 {offsets = [5, 0], sizes = [1, 32], strides = [1, 1]} : vector<9x32xf32> to vector<1x32xf32>
    %102 = vector.extract_strided_slice %9 {offsets = [6, 0], sizes = [1, 32], strides = [1, 1]} : vector<9x32xf32> to vector<1x32xf32>
    %cst_44 = arith.constant dense<0.000000e+00> : vector<8xf32>
    %103 = vector.multi_reduction <add>, %100, %cst_44 [1] : vector<8x32xf32> to vector<8xf32>
    %104 = vector.shape_cast %103 : vector<8xf32> to vector<8x1xf32>
    %cst_45 = arith.constant 3.200000e+01 : f32
    %105 = vector.broadcast %cst_45 : f32 to vector<8x1xf32>
    %106 = arith.divf %104, %105 : vector<8x1xf32>
    %107 = vector.broadcast %106 : vector<8x1xf32> to vector<8x32xf32>
    %108 = arith.subf %100, %107 : vector<8x32xf32>
    %109 = arith.mulf %108, %108 : vector<8x32xf32>
    %cst_46 = arith.constant dense<0.000000e+00> : vector<8xf32>
    %110 = vector.multi_reduction <add>, %109, %cst_46 [1] : vector<8x32xf32> to vector<8xf32>
    %111 = vector.shape_cast %110 : vector<8xf32> to vector<8x1xf32>
    %cst_47 = arith.constant 3.200000e+01 : f32
    %112 = vector.broadcast %cst_47 : f32 to vector<8x1xf32>
    %113 = arith.divf %111, %112 : vector<8x1xf32>
    %114 = vector.broadcast %106 : vector<8x1xf32> to vector<8x32xf32>
    %115 = arith.subf %100, %114 : vector<8x32xf32>
    %cst_48 = arith.constant 9.99999974E-6 : f32
    %116 = vector.broadcast %cst_48 : f32 to vector<8x1xf32>
    %117 = arith.addf %113, %116 : vector<8x1xf32>
    %118 = math.rsqrt %117 : vector<8x1xf32>
    %119 = vector.broadcast %118 : vector<8x1xf32> to vector<8x32xf32>
    %120 = arith.mulf %115, %119 : vector<8x32xf32>
    %121 = vector.broadcast %101 : vector<1x32xf32> to vector<8x32xf32>
    %122 = arith.mulf %120, %121 : vector<8x32xf32>
    %123 = vector.broadcast %102 : vector<1x32xf32> to vector<8x32xf32>
    %124 = arith.addf %122, %123 : vector<8x32xf32>
    %c0_49 = arith.constant 0 : index
    %c0_50 = arith.constant 0 : index
    %c0_51 = arith.constant 0 : index
    %125 = vector.load %arg6[%c0_49, %c0_50, %c0_51] : memref<2x32x64xf32, #tpu.memory_space<vmem>>, vector<1x32x64xf32>
    %126 = vector.shape_cast %125 : vector<1x32x64xf32> to vector<32x64xf32>
    %cst_52 = arith.constant dense<0.000000e+00> : vector<8x64xf32>
    %127 = tpu.matmul %124, %126, %cst_52 {dimension_numbers = #tpu.dot_dimension_numbers<[1], [0], [0], [1], [0, 0, 1, 1], [], []>} : vector<8x32xf32>, vector<32x64xf32>, vector<8x64xf32> -> vector<8x64xf32>
    %c0_53 = arith.constant 0 : index
    %c0_54 = arith.constant 0 : index
    %c0_55 = arith.constant 0 : index
    %128 = vector.load %arg7[%c0_53, %c0_54, %c0_55] : memref<2x1x64xf32, #tpu.memory_space<vmem>>, vector<1x1x64xf32>
    %129 = vector.shape_cast %128 : vector<1x1x64xf32> to vector<1x64xf32>
    %130 = vector.broadcast %129 : vector<1x64xf32> to vector<8x64xf32>
    %131 = arith.addf %127, %130 : vector<8x64xf32>
    %cst_56 = arith.constant 5.000000e-01 : f32
    %132 = vector.broadcast %cst_56 : f32 to vector<8x64xf32>
    %133 = arith.mulf %132, %131 : vector<8x64xf32>
    %cst_57 = arith.constant 0.707106769 : f32
    %134 = vector.broadcast %cst_57 : f32 to vector<8x64xf32>
    %135 = arith.mulf %131, %134 : vector<8x64xf32>
    %136 = math.absf %135 : vector<8x64xf32>
    %cst_58 = arith.constant 0.327591091 : f32
    %137 = vector.broadcast %cst_58 : f32 to vector<8x64xf32>
    %138 = arith.mulf %137, %136 : vector<8x64xf32>
    %cst_59 = arith.constant 1.000000e+00 : f32
    %139 = vector.broadcast %cst_59 : f32 to vector<8x64xf32>
    %140 = arith.addf %139, %138 : vector<8x64xf32>
    %cst_60 = arith.constant 1.000000e+00 : f32
    %141 = vector.broadcast %cst_60 : f32 to vector<8x64xf32>
    %142 = arith.divf %141, %140 : vector<8x64xf32>
    %cst_61 = arith.constant 1.06140542 : f32
    %143 = vector.broadcast %cst_61 : f32 to vector<8x64xf32>
    %144 = arith.mulf %143, %142 : vector<8x64xf32>
    %cst_62 = arith.constant -1.45315206 : f32
    %145 = vector.broadcast %cst_62 : f32 to vector<8x64xf32>
    %146 = arith.addf %144, %145 : vector<8x64xf32>
    %147 = arith.mulf %146, %142 : vector<8x64xf32>
    %cst_63 = arith.constant 1.42141378 : f32
    %148 = vector.broadcast %cst_63 : f32 to vector<8x64xf32>
    %149 = arith.addf %147, %148 : vector<8x64xf32>
    %150 = arith.mulf %149, %142 : vector<8x64xf32>
    %cst_64 = arith.constant -0.284496725 : f32
    %151 = vector.broadcast %cst_64 : f32 to vector<8x64xf32>
    %152 = arith.addf %150, %151 : vector<8x64xf32>
    %153 = arith.mulf %152, %142 : vector<8x64xf32>
    %cst_65 = arith.constant 0.254829586 : f32
    %154 = vector.broadcast %cst_65 : f32 to vector<8x64xf32>
    %155 = arith.addf %153, %154 : vector<8x64xf32>
    %156 = arith.mulf %155, %142 : vector<8x64xf32>
    %cst_66 = arith.constant 0.000000e+00 : f32
    %157 = vector.broadcast %cst_66 : f32 to vector<8x64xf32>
    %158 = arith.subf %157, %136 : vector<8x64xf32>
    %159 = arith.mulf %158, %136 : vector<8x64xf32>
    %160 = math.exp %159 : vector<8x64xf32>
    %161 = arith.mulf %156, %160 : vector<8x64xf32>
    %cst_67 = arith.constant 1.000000e+00 : f32
    %162 = vector.broadcast %cst_67 : f32 to vector<8x64xf32>
    %163 = arith.subf %162, %161 : vector<8x64xf32>
    %cst_68 = arith.constant 0.000000e+00 : f32
    %164 = vector.broadcast %cst_68 : f32 to vector<8x64xf32>
    %165 = arith.cmpf olt, %135, %164 : vector<8x64xf32>
    %cst_69 = arith.constant 0.000000e+00 : f32
    %166 = vector.broadcast %cst_69 : f32 to vector<8x64xf32>
    %167 = arith.subf %166, %163 : vector<8x64xf32>
    %168 = arith.select %165, %167, %163 : vector<8x64xi1>, vector<8x64xf32>
    %cst_70 = arith.constant 1.000000e+00 : f32
    %169 = vector.broadcast %cst_70 : f32 to vector<8x64xf32>
    %170 = arith.addf %169, %168 : vector<8x64xf32>
    %171 = arith.mulf %133, %170 : vector<8x64xf32>
    %c0_71 = arith.constant 0 : index
    %c0_72 = arith.constant 0 : index
    %c0_73 = arith.constant 0 : index
    %172 = vector.load %arg8[%c0_71, %c0_72, %c0_73] : memref<2x64x32xf32, #tpu.memory_space<vmem>>, vector<1x64x32xf32>
    %173 = vector.shape_cast %172 : vector<1x64x32xf32> to vector<64x32xf32>
    %cst_74 = arith.constant dense<0.000000e+00> : vector<8x32xf32>
    %174 = tpu.matmul %171, %173, %cst_74 {dimension_numbers = #tpu.dot_dimension_numbers<[1], [0], [0], [1], [0, 0, 1, 1], [], []>} : vector<8x64xf32>, vector<64x32xf32>, vector<8x32xf32> -> vector<8x32xf32>
    %175 = vector.extract_strided_slice %9 {offsets = [4, 0], sizes = [1, 32], strides = [1, 1]} : vector<9x32xf32> to vector<1x32xf32>
    %176 = vector.broadcast %175 : vector<1x32xf32> to vector<8x32xf32>
    %177 = arith.addf %174, %176 : vector<8x32xf32>
    %178 = arith.addf %124, %177 : vector<8x32xf32>
    %179 = vector.extract_strided_slice %9 {offsets = [7, 0], sizes = [1, 32], strides = [1, 1]} : vector<9x32xf32> to vector<1x32xf32>
    %180 = vector.extract_strided_slice %9 {offsets = [8, 0], sizes = [1, 32], strides = [1, 1]} : vector<9x32xf32> to vector<1x32xf32>
    %cst_75 = arith.constant dense<0.000000e+00> : vector<8xf32>
    %181 = vector.multi_reduction <add>, %178, %cst_75 [1] : vector<8x32xf32> to vector<8xf32>
    %182 = vector.shape_cast %181 : vector<8xf32> to vector<8x1xf32>
    %cst_76 = arith.constant 3.200000e+01 : f32
    %183 = vector.broadcast %cst_76 : f32 to vector<8x1xf32>
    %184 = arith.divf %182, %183 : vector<8x1xf32>
    %185 = vector.broadcast %184 : vector<8x1xf32> to vector<8x32xf32>
    %186 = arith.subf %178, %185 : vector<8x32xf32>
    %187 = arith.mulf %186, %186 : vector<8x32xf32>
    %cst_77 = arith.constant dense<0.000000e+00> : vector<8xf32>
    %188 = vector.multi_reduction <add>, %187, %cst_77 [1] : vector<8x32xf32> to vector<8xf32>
    %189 = vector.shape_cast %188 : vector<8xf32> to vector<8x1xf32>
    %cst_78 = arith.constant 3.200000e+01 : f32
    %190 = vector.broadcast %cst_78 : f32 to vector<8x1xf32>
    %191 = arith.divf %189, %190 : vector<8x1xf32>
    %192 = vector.broadcast %184 : vector<8x1xf32> to vector<8x32xf32>
    %193 = arith.subf %178, %192 : vector<8x32xf32>
    %cst_79 = arith.constant 9.99999974E-6 : f32
    %194 = vector.broadcast %cst_79 : f32 to vector<8x1xf32>
    %195 = arith.addf %191, %194 : vector<8x1xf32>
    %196 = math.rsqrt %195 : vector<8x1xf32>
    %197 = vector.broadcast %196 : vector<8x1xf32> to vector<8x32xf32>
    %198 = arith.mulf %193, %197 : vector<8x32xf32>
    %199 = vector.broadcast %179 : vector<1x32xf32> to vector<8x32xf32>
    %200 = arith.mulf %198, %199 : vector<8x32xf32>
    %201 = vector.broadcast %180 : vector<1x32xf32> to vector<8x32xf32>
    %202 = arith.addf %200, %201 : vector<8x32xf32>
    %c1 = arith.constant 1 : index
    %c0_80 = arith.constant 0 : index
    %c0_81 = arith.constant 0 : index
    %203 = vector.load %arg9[%c1, %c0_80, %c0_81] : memref<2x9x32xf32, #tpu.memory_space<vmem>>, vector<1x9x32xf32>
    %204 = vector.shape_cast %203 : vector<1x9x32xf32> to vector<9x32xf32>
    %c1_82 = arith.constant 1 : index
    %c0_83 = arith.constant 0 : index
    %c0_84 = arith.constant 0 : index
    %205 = vector.load %arg4[%c1_82, %c0_83, %c0_84] : memref<2x32x96xf32, #tpu.memory_space<vmem>>, vector<1x32x96xf32>
    %206 = vector.shape_cast %205 : vector<1x32x96xf32> to vector<32x96xf32>
    %cst_85 = arith.constant dense<0.000000e+00> : vector<8x96xf32>
    %207 = tpu.matmul %202, %206, %cst_85 {dimension_numbers = #tpu.dot_dimension_numbers<[1], [0], [0], [1], [0, 0, 1, 1], [], []>} : vector<8x32xf32>, vector<32x96xf32>, vector<8x96xf32> -> vector<8x96xf32>
    %208 = vector.extract_strided_slice %207 {offsets = [0, 0], sizes = [8, 32], strides = [1, 1]} : vector<8x96xf32> to vector<8x32xf32>
    %209 = vector.extract_strided_slice %204 {offsets = [0, 0], sizes = [1, 32], strides = [1, 1]} : vector<9x32xf32> to vector<1x32xf32>
    %210 = vector.broadcast %209 : vector<1x32xf32> to vector<8x32xf32>
    %211 = arith.addf %208, %210 : vector<8x32xf32>
    %212 = vector.extract_strided_slice %207 {offsets = [0, 32], sizes = [8, 32], strides = [1, 1]} : vector<8x96xf32> to vector<8x32xf32>
    %213 = vector.extract_strided_slice %204 {offsets = [1, 0], sizes = [1, 32], strides = [1, 1]} : vector<9x32xf32> to vector<1x32xf32>
    %214 = vector.broadcast %213 : vector<1x32xf32> to vector<8x32xf32>
    %215 = arith.addf %212, %214 : vector<8x32xf32>
    %216 = vector.extract_strided_slice %207 {offsets = [0, 64], sizes = [8, 32], strides = [1, 1]} : vector<8x96xf32> to vector<8x32xf32>
    %217 = vector.extract_strided_slice %204 {offsets = [2, 0], sizes = [1, 32], strides = [1, 1]} : vector<9x32xf32> to vector<1x32xf32>
    %218 = vector.broadcast %217 : vector<1x32xf32> to vector<8x32xf32>
    %219 = arith.addf %216, %218 : vector<8x32xf32>
    %220 = vector.extract_strided_slice %211 {offsets = [0, 0], sizes = [8, 8], strides = [1, 1]} : vector<8x32xf32> to vector<8x8xf32>
    %221 = vector.extract_strided_slice %215 {offsets = [0, 0], sizes = [8, 8], strides = [1, 1]} : vector<8x32xf32> to vector<8x8xf32>
    %222 = vector.extract_strided_slice %219 {offsets = [0, 0], sizes = [8, 8], strides = [1, 1]} : vector<8x32xf32> to vector<8x8xf32>
    %cst_86 = arith.constant dense<0.000000e+00> : vector<8x8xf32>
    %223 = tpu.matmul %220, %221, %cst_86 {dimension_numbers = #tpu.dot_dimension_numbers<[1], [1], [0], [0], [0, 0, 1, 0], [], []>} : vector<8x8xf32>, vector<8x8xf32>, vector<8x8xf32> -> vector<8x8xf32>
    %cst_87 = arith.constant 0.353553385 : f32
    %224 = vector.broadcast %cst_87 : f32 to vector<8x8xf32>
    %225 = arith.mulf %223, %224 : vector<8x8xf32>
    %cst_88 = arith.constant dense<0xFF800000> : vector<8xf32>
    %226 = vector.multi_reduction <maximumf>, %225, %cst_88 [1] : vector<8x8xf32> to vector<8xf32>
    %227 = vector.shape_cast %226 : vector<8xf32> to vector<8x1xf32>
    %228 = vector.broadcast %227 : vector<8x1xf32> to vector<8x8xf32>
    %229 = arith.subf %225, %228 : vector<8x8xf32>
    %230 = math.exp %229 : vector<8x8xf32>
    %cst_89 = arith.constant dense<0.000000e+00> : vector<8xf32>
    %231 = vector.multi_reduction <add>, %230, %cst_89 [1] : vector<8x8xf32> to vector<8xf32>
    %232 = vector.shape_cast %231 : vector<8xf32> to vector<8x1xf32>
    %233 = vector.broadcast %232 : vector<8x1xf32> to vector<8x8xf32>
    %234 = arith.divf %230, %233 : vector<8x8xf32>
    %cst_90 = arith.constant dense<0.000000e+00> : vector<8x8xf32>
    %235 = tpu.matmul %234, %222, %cst_90 {dimension_numbers = #tpu.dot_dimension_numbers<[1], [0], [0], [1], [0, 0, 1, 1], [], []>} : vector<8x8xf32>, vector<8x8xf32>, vector<8x8xf32> -> vector<8x8xf32>
    %c0_91 = arith.constant 0 : index
    %c0_92 = arith.constant 0 : index
    %236 = vector.load %arg12[%c0_91, %c0_92] : memref<8x32xf32, #tpu.memory_space<vmem>>, vector<8x8xf32>
    tpu.vector_store %arg12[%c0_91, %c0_92], %235 {strides = array<i32>} : memref<8x32xf32, #tpu.memory_space<vmem>>, vector<8x8xf32>,
    %237 = vector.extract_strided_slice %211 {offsets = [0, 8], sizes = [8, 8], strides = [1, 1]} : vector<8x32xf32> to vector<8x8xf32>
    %238 = vector.extract_strided_slice %215 {offsets = [0, 8], sizes = [8, 8], strides = [1, 1]} : vector<8x32xf32> to vector<8x8xf32>
    %239 = vector.extract_strided_slice %219 {offsets = [0, 8], sizes = [8, 8], strides = [1, 1]} : vector<8x32xf32> to vector<8x8xf32>
    %cst_93 = arith.constant dense<0.000000e+00> : vector<8x8xf32>
    %240 = tpu.matmul %237, %238, %cst_93 {dimension_numbers = #tpu.dot_dimension_numbers<[1], [1], [0], [0], [0, 0, 1, 0], [], []>} : vector<8x8xf32>, vector<8x8xf32>, vector<8x8xf32> -> vector<8x8xf32>
    %cst_94 = arith.constant 0.353553385 : f32
    %241 = vector.broadcast %cst_94 : f32 to vector<8x8xf32>
    %242 = arith.mulf %240, %241 : vector<8x8xf32>
    %cst_95 = arith.constant dense<0xFF800000> : vector<8xf32>
    %243 = vector.multi_reduction <maximumf>, %242, %cst_95 [1] : vector<8x8xf32> to vector<8xf32>
    %244 = vector.shape_cast %243 : vector<8xf32> to vector<8x1xf32>
    %245 = vector.broadcast %244 : vector<8x1xf32> to vector<8x8xf32>
    %246 = arith.subf %242, %245 : vector<8x8xf32>
    %247 = math.exp %246 : vector<8x8xf32>
    %cst_96 = arith.constant dense<0.000000e+00> : vector<8xf32>
    %248 = vector.multi_reduction <add>, %247, %cst_96 [1] : vector<8x8xf32> to vector<8xf32>
    %249 = vector.shape_cast %248 : vector<8xf32> to vector<8x1xf32>
    %250 = vector.broadcast %249 : vector<8x1xf32> to vector<8x8xf32>
    %251 = arith.divf %247, %250 : vector<8x8xf32>
    %cst_97 = arith.constant dense<0.000000e+00> : vector<8x8xf32>
    %252 = tpu.matmul %251, %239, %cst_97 {dimension_numbers = #tpu.dot_dimension_numbers<[1], [0], [0], [1], [0, 0, 1, 1], [], []>} : vector<8x8xf32>, vector<8x8xf32>, vector<8x8xf32> -> vector<8x8xf32>
    %c0_98 = arith.constant 0 : index
    %c8_99 = arith.constant 8 : index
    %253 = vector.load %arg12[%c0_98, %c8_99] : memref<8x32xf32, #tpu.memory_space<vmem>>, vector<8x8xf32>
    tpu.vector_store %arg12[%c0_98, %c8_99], %252 {strides = array<i32>} : memref<8x32xf32, #tpu.memory_space<vmem>>, vector<8x8xf32>,
    %254 = vector.extract_strided_slice %211 {offsets = [0, 16], sizes = [8, 8], strides = [1, 1]} : vector<8x32xf32> to vector<8x8xf32>
    %255 = vector.extract_strided_slice %215 {offsets = [0, 16], sizes = [8, 8], strides = [1, 1]} : vector<8x32xf32> to vector<8x8xf32>
    %256 = vector.extract_strided_slice %219 {offsets = [0, 16], sizes = [8, 8], strides = [1, 1]} : vector<8x32xf32> to vector<8x8xf32>
    %cst_100 = arith.constant dense<0.000000e+00> : vector<8x8xf32>
    %257 = tpu.matmul %254, %255, %cst_100 {dimension_numbers = #tpu.dot_dimension_numbers<[1], [1], [0], [0], [0, 0, 1, 0], [], []>} : vector<8x8xf32>, vector<8x8xf32>, vector<8x8xf32> -> vector<8x8xf32>
    %cst_101 = arith.constant 0.353553385 : f32
    %258 = vector.broadcast %cst_101 : f32 to vector<8x8xf32>
    %259 = arith.mulf %257, %258 : vector<8x8xf32>
    %cst_102 = arith.constant dense<0xFF800000> : vector<8xf32>
    %260 = vector.multi_reduction <maximumf>, %259, %cst_102 [1] : vector<8x8xf32> to vector<8xf32>
    %261 = vector.shape_cast %260 : vector<8xf32> to vector<8x1xf32>
    %262 = vector.broadcast %261 : vector<8x1xf32> to vector<8x8xf32>
    %263 = arith.subf %259, %262 : vector<8x8xf32>
    %264 = math.exp %263 : vector<8x8xf32>
    %cst_103 = arith.constant dense<0.000000e+00> : vector<8xf32>
    %265 = vector.multi_reduction <add>, %264, %cst_103 [1] : vector<8x8xf32> to vector<8xf32>
    %266 = vector.shape_cast %265 : vector<8xf32> to vector<8x1xf32>
    %267 = vector.broadcast %266 : vector<8x1xf32> to vector<8x8xf32>
    %268 = arith.divf %264, %267 : vector<8x8xf32>
    %cst_104 = arith.constant dense<0.000000e+00> : vector<8x8xf32>
    %269 = tpu.matmul %268, %256, %cst_104 {dimension_numbers = #tpu.dot_dimension_numbers<[1], [0], [0], [1], [0, 0, 1, 1], [], []>} : vector<8x8xf32>, vector<8x8xf32>, vector<8x8xf32> -> vector<8x8xf32>
    %c0_105 = arith.constant 0 : index
    %c16_106 = arith.constant 16 : index
    %270 = vector.load %arg12[%c0_105, %c16_106] : memref<8x32xf32, #tpu.memory_space<vmem>>, vector<8x8xf32>
    tpu.vector_store %arg12[%c0_105, %c16_106], %269 {strides = array<i32>} : memref<8x32xf32, #tpu.memory_space<vmem>>, vector<8x8xf32>,
    %271 = vector.extract_strided_slice %211 {offsets = [0, 24], sizes = [8, 8], strides = [1, 1]} : vector<8x32xf32> to vector<8x8xf32>
    %272 = vector.extract_strided_slice %215 {offsets = [0, 24], sizes = [8, 8], strides = [1, 1]} : vector<8x32xf32> to vector<8x8xf32>
    %273 = vector.extract_strided_slice %219 {offsets = [0, 24], sizes = [8, 8], strides = [1, 1]} : vector<8x32xf32> to vector<8x8xf32>
    %cst_107 = arith.constant dense<0.000000e+00> : vector<8x8xf32>
    %274 = tpu.matmul %271, %272, %cst_107 {dimension_numbers = #tpu.dot_dimension_numbers<[1], [1], [0], [0], [0, 0, 1, 0], [], []>} : vector<8x8xf32>, vector<8x8xf32>, vector<8x8xf32> -> vector<8x8xf32>
    %cst_108 = arith.constant 0.353553385 : f32
    %275 = vector.broadcast %cst_108 : f32 to vector<8x8xf32>
    %276 = arith.mulf %274, %275 : vector<8x8xf32>
    %cst_109 = arith.constant dense<0xFF800000> : vector<8xf32>
    %277 = vector.multi_reduction <maximumf>, %276, %cst_109 [1] : vector<8x8xf32> to vector<8xf32>
    %278 = vector.shape_cast %277 : vector<8xf32> to vector<8x1xf32>
    %279 = vector.broadcast %278 : vector<8x1xf32> to vector<8x8xf32>
    %280 = arith.subf %276, %279 : vector<8x8xf32>
    %281 = math.exp %280 : vector<8x8xf32>
    %cst_110 = arith.constant dense<0.000000e+00> : vector<8xf32>
    %282 = vector.multi_reduction <add>, %281, %cst_110 [1] : vector<8x8xf32> to vector<8xf32>
    %283 = vector.shape_cast %282 : vector<8xf32> to vector<8x1xf32>
    %284 = vector.broadcast %283 : vector<8x1xf32> to vector<8x8xf32>
    %285 = arith.divf %281, %284 : vector<8x8xf32>
    %cst_111 = arith.constant dense<0.000000e+00> : vector<8x8xf32>
    %286 = tpu.matmul %285, %273, %cst_111 {dimension_numbers = #tpu.dot_dimension_numbers<[1], [0], [0], [1], [0, 0, 1, 1], [], []>} : vector<8x8xf32>, vector<8x8xf32>, vector<8x8xf32> -> vector<8x8xf32>
    %c0_112 = arith.constant 0 : index
    %c24_113 = arith.constant 24 : index
    %287 = vector.load %arg12[%c0_112, %c24_113] : memref<8x32xf32, #tpu.memory_space<vmem>>, vector<8x8xf32>
    tpu.vector_store %arg12[%c0_112, %c24_113], %286 {strides = array<i32>} : memref<8x32xf32, #tpu.memory_space<vmem>>, vector<8x8xf32>,
    %c0_114 = arith.constant 0 : index
    %c0_115 = arith.constant 0 : index
    %288 = vector.load %arg12[%c0_114, %c0_115] : memref<8x32xf32, #tpu.memory_space<vmem>>, vector<8x32xf32>
    %c1_116 = arith.constant 1 : index
    %c0_117 = arith.constant 0 : index
    %c0_118 = arith.constant 0 : index
    %289 = vector.load %arg5[%c1_116, %c0_117, %c0_118] : memref<2x32x32xf32, #tpu.memory_space<vmem>>, vector<1x32x32xf32>
    %290 = vector.shape_cast %289 : vector<1x32x32xf32> to vector<32x32xf32>
    %cst_119 = arith.constant dense<0.000000e+00> : vector<8x32xf32>
    %291 = tpu.matmul %288, %290, %cst_119 {dimension_numbers = #tpu.dot_dimension_numbers<[1], [0], [0], [1], [0, 0, 1, 1], [], []>} : vector<8x32xf32>, vector<32x32xf32>, vector<8x32xf32> -> vector<8x32xf32>
    %292 = vector.extract_strided_slice %204 {offsets = [3, 0], sizes = [1, 32], strides = [1, 1]} : vector<9x32xf32> to vector<1x32xf32>
    %293 = vector.broadcast %292 : vector<1x32xf32> to vector<8x32xf32>
    %294 = arith.addf %291, %293 : vector<8x32xf32>
    %295 = arith.addf %202, %294 : vector<8x32xf32>
    %296 = vector.extract_strided_slice %204 {offsets = [5, 0], sizes = [1, 32], strides = [1, 1]} : vector<9x32xf32> to vector<1x32xf32>
    %297 = vector.extract_strided_slice %204 {offsets = [6, 0], sizes = [1, 32], strides = [1, 1]} : vector<9x32xf32> to vector<1x32xf32>
    %cst_120 = arith.constant dense<0.000000e+00> : vector<8xf32>
    %298 = vector.multi_reduction <add>, %295, %cst_120 [1] : vector<8x32xf32> to vector<8xf32>
    %299 = vector.shape_cast %298 : vector<8xf32> to vector<8x1xf32>
    %cst_121 = arith.constant 3.200000e+01 : f32
    %300 = vector.broadcast %cst_121 : f32 to vector<8x1xf32>
    %301 = arith.divf %299, %300 : vector<8x1xf32>
    %302 = vector.broadcast %301 : vector<8x1xf32> to vector<8x32xf32>
    %303 = arith.subf %295, %302 : vector<8x32xf32>
    %304 = arith.mulf %303, %303 : vector<8x32xf32>
    %cst_122 = arith.constant dense<0.000000e+00> : vector<8xf32>
    %305 = vector.multi_reduction <add>, %304, %cst_122 [1] : vector<8x32xf32> to vector<8xf32>
    %306 = vector.shape_cast %305 : vector<8xf32> to vector<8x1xf32>
    %cst_123 = arith.constant 3.200000e+01 : f32
    %307 = vector.broadcast %cst_123 : f32 to vector<8x1xf32>
    %308 = arith.divf %306, %307 : vector<8x1xf32>
    %309 = vector.broadcast %301 : vector<8x1xf32> to vector<8x32xf32>
    %310 = arith.subf %295, %309 : vector<8x32xf32>
    %cst_124 = arith.constant 9.99999974E-6 : f32
    %311 = vector.broadcast %cst_124 : f32 to vector<8x1xf32>
    %312 = arith.addf %308, %311 : vector<8x1xf32>
    %313 = math.rsqrt %312 : vector<8x1xf32>
    %314 = vector.broadcast %313 : vector<8x1xf32> to vector<8x32xf32>
    %315 = arith.mulf %310, %314 : vector<8x32xf32>
    %316 = vector.broadcast %296 : vector<1x32xf32> to vector<8x32xf32>
    %317 = arith.mulf %315, %316 : vector<8x32xf32>
    %318 = vector.broadcast %297 : vector<1x32xf32> to vector<8x32xf32>
    %319 = arith.addf %317, %318 : vector<8x32xf32>
    %c1_125 = arith.constant 1 : index
    %c0_126 = arith.constant 0 : index
    %c0_127 = arith.constant 0 : index
    %320 = vector.load %arg6[%c1_125, %c0_126, %c0_127] : memref<2x32x64xf32, #tpu.memory_space<vmem>>, vector<1x32x64xf32>
    %321 = vector.shape_cast %320 : vector<1x32x64xf32> to vector<32x64xf32>
    %cst_128 = arith.constant dense<0.000000e+00> : vector<8x64xf32>
    %322 = tpu.matmul %319, %321, %cst_128 {dimension_numbers = #tpu.dot_dimension_numbers<[1], [0], [0], [1], [0, 0, 1, 1], [], []>} : vector<8x32xf32>, vector<32x64xf32>, vector<8x64xf32> -> vector<8x64xf32>
    %c1_129 = arith.constant 1 : index
    %c0_130 = arith.constant 0 : index
    %c0_131 = arith.constant 0 : index
    %323 = vector.load %arg7[%c1_129, %c0_130, %c0_131] : memref<2x1x64xf32, #tpu.memory_space<vmem>>, vector<1x1x64xf32>
    %324 = vector.shape_cast %323 : vector<1x1x64xf32> to vector<1x64xf32>
    %325 = vector.broadcast %324 : vector<1x64xf32> to vector<8x64xf32>
    %326 = arith.addf %322, %325 : vector<8x64xf32>
    %cst_132 = arith.constant 5.000000e-01 : f32
    %327 = vector.broadcast %cst_132 : f32 to vector<8x64xf32>
    %328 = arith.mulf %327, %326 : vector<8x64xf32>
    %cst_133 = arith.constant 0.707106769 : f32
    %329 = vector.broadcast %cst_133 : f32 to vector<8x64xf32>
    %330 = arith.mulf %326, %329 : vector<8x64xf32>
    %331 = math.absf %330 : vector<8x64xf32>
    %cst_134 = arith.constant 0.327591091 : f32
    %332 = vector.broadcast %cst_134 : f32 to vector<8x64xf32>
    %333 = arith.mulf %332, %331 : vector<8x64xf32>
    %cst_135 = arith.constant 1.000000e+00 : f32
    %334 = vector.broadcast %cst_135 : f32 to vector<8x64xf32>
    %335 = arith.addf %334, %333 : vector<8x64xf32>
    %cst_136 = arith.constant 1.000000e+00 : f32
    %336 = vector.broadcast %cst_136 : f32 to vector<8x64xf32>
    %337 = arith.divf %336, %335 : vector<8x64xf32>
    %cst_137 = arith.constant 1.06140542 : f32
    %338 = vector.broadcast %cst_137 : f32 to vector<8x64xf32>
    %339 = arith.mulf %338, %337 : vector<8x64xf32>
    %cst_138 = arith.constant -1.45315206 : f32
    %340 = vector.broadcast %cst_138 : f32 to vector<8x64xf32>
    %341 = arith.addf %339, %340 : vector<8x64xf32>
    %342 = arith.mulf %341, %337 : vector<8x64xf32>
    %cst_139 = arith.constant 1.42141378 : f32
    %343 = vector.broadcast %cst_139 : f32 to vector<8x64xf32>
    %344 = arith.addf %342, %343 : vector<8x64xf32>
    %345 = arith.mulf %344, %337 : vector<8x64xf32>
    %cst_140 = arith.constant -0.284496725 : f32
    %346 = vector.broadcast %cst_140 : f32 to vector<8x64xf32>
    %347 = arith.addf %345, %346 : vector<8x64xf32>
    %348 = arith.mulf %347, %337 : vector<8x64xf32>
    %cst_141 = arith.constant 0.254829586 : f32
    %349 = vector.broadcast %cst_141 : f32 to vector<8x64xf32>
    %350 = arith.addf %348, %349 : vector<8x64xf32>
    %351 = arith.mulf %350, %337 : vector<8x64xf32>
    %cst_142 = arith.constant 0.000000e+00 : f32
    %352 = vector.broadcast %cst_142 : f32 to vector<8x64xf32>
    %353 = arith.subf %352, %331 : vector<8x64xf32>
    %354 = arith.mulf %353, %331 : vector<8x64xf32>
    %355 = math.exp %354 : vector<8x64xf32>
    %356 = arith.mulf %351, %355 : vector<8x64xf32>
    %cst_143 = arith.constant 1.000000e+00 : f32
    %357 = vector.broadcast %cst_143 : f32 to vector<8x64xf32>
    %358 = arith.subf %357, %356 : vector<8x64xf32>
    %cst_144 = arith.constant 0.000000e+00 : f32
    %359 = vector.broadcast %cst_144 : f32 to vector<8x64xf32>
    %360 = arith.cmpf olt, %330, %359 : vector<8x64xf32>
    %cst_145 = arith.constant 0.000000e+00 : f32
    %361 = vector.broadcast %cst_145 : f32 to vector<8x64xf32>
    %362 = arith.subf %361, %358 : vector<8x64xf32>
    %363 = arith.select %360, %362, %358 : vector<8x64xi1>, vector<8x64xf32>
    %cst_146 = arith.constant 1.000000e+00 : f32
    %364 = vector.broadcast %cst_146 : f32 to vector<8x64xf32>
    %365 = arith.addf %364, %363 : vector<8x64xf32>
    %366 = arith.mulf %328, %365 : vector<8x64xf32>
    %c1_147 = arith.constant 1 : index
    %c0_148 = arith.constant 0 : index
    %c0_149 = arith.constant 0 : index
    %367 = vector.load %arg8[%c1_147, %c0_148, %c0_149] : memref<2x64x32xf32, #tpu.memory_space<vmem>>, vector<1x64x32xf32>
    %368 = vector.shape_cast %367 : vector<1x64x32xf32> to vector<64x32xf32>
    %cst_150 = arith.constant dense<0.000000e+00> : vector<8x32xf32>
    %369 = tpu.matmul %366, %368, %cst_150 {dimension_numbers = #tpu.dot_dimension_numbers<[1], [0], [0], [1], [0, 0, 1, 1], [], []>} : vector<8x64xf32>, vector<64x32xf32>, vector<8x32xf32> -> vector<8x32xf32>
    %370 = vector.extract_strided_slice %204 {offsets = [4, 0], sizes = [1, 32], strides = [1, 1]} : vector<9x32xf32> to vector<1x32xf32>
    %371 = vector.broadcast %370 : vector<1x32xf32> to vector<8x32xf32>
    %372 = arith.addf %369, %371 : vector<8x32xf32>
    %373 = arith.addf %319, %372 : vector<8x32xf32>
    %374 = vector.extract_strided_slice %204 {offsets = [7, 0], sizes = [1, 32], strides = [1, 1]} : vector<9x32xf32> to vector<1x32xf32>
    %375 = vector.extract_strided_slice %204 {offsets = [8, 0], sizes = [1, 32], strides = [1, 1]} : vector<9x32xf32> to vector<1x32xf32>
    %cst_151 = arith.constant dense<0.000000e+00> : vector<8xf32>
    %376 = vector.multi_reduction <add>, %373, %cst_151 [1] : vector<8x32xf32> to vector<8xf32>
    %377 = vector.shape_cast %376 : vector<8xf32> to vector<8x1xf32>
    %cst_152 = arith.constant 3.200000e+01 : f32
    %378 = vector.broadcast %cst_152 : f32 to vector<8x1xf32>
    %379 = arith.divf %377, %378 : vector<8x1xf32>
    %380 = vector.broadcast %379 : vector<8x1xf32> to vector<8x32xf32>
    %381 = arith.subf %373, %380 : vector<8x32xf32>
    %382 = arith.mulf %381, %381 : vector<8x32xf32>
    %cst_153 = arith.constant dense<0.000000e+00> : vector<8xf32>
    %383 = vector.multi_reduction <add>, %382, %cst_153 [1] : vector<8x32xf32> to vector<8xf32>
    %384 = vector.shape_cast %383 : vector<8xf32> to vector<8x1xf32>
    %cst_154 = arith.constant 3.200000e+01 : f32
    %385 = vector.broadcast %cst_154 : f32 to vector<8x1xf32>
    %386 = arith.divf %384, %385 : vector<8x1xf32>
    %387 = vector.broadcast %379 : vector<8x1xf32> to vector<8x32xf32>
    %388 = arith.subf %373, %387 : vector<8x32xf32>
    %cst_155 = arith.constant 9.99999974E-6 : f32
    %389 = vector.broadcast %cst_155 : f32 to vector<8x1xf32>
    %390 = arith.addf %386, %389 : vector<8x1xf32>
    %391 = math.rsqrt %390 : vector<8x1xf32>
    %392 = vector.broadcast %391 : vector<8x1xf32> to vector<8x32xf32>
    %393 = arith.mulf %388, %392 : vector<8x32xf32>
    %394 = vector.broadcast %374 : vector<1x32xf32> to vector<8x32xf32>
    %395 = arith.mulf %393, %394 : vector<8x32xf32>
    %396 = vector.broadcast %375 : vector<1x32xf32> to vector<8x32xf32>
    %397 = arith.addf %395, %396 : vector<8x32xf32>
    %c0_156 = arith.constant 0 : index
    %c0_157 = arith.constant 0 : index
    %398 = vector.load %arg10[%c0_156, %c0_157] : memref<2x32xf32, #tpu.memory_space<vmem>>, vector<2x32xf32>
    %399 = vector.extract_strided_slice %398 {offsets = [0, 0], sizes = [1, 32], strides = [1, 1]} : vector<2x32xf32> to vector<1x32xf32>
    %400 = vector.extract_strided_slice %398 {offsets = [1, 0], sizes = [1, 32], strides = [1, 1]} : vector<2x32xf32> to vector<1x32xf32>
    %cst_158 = arith.constant dense<0.000000e+00> : vector<8xf32>
    %401 = vector.multi_reduction <add>, %397, %cst_158 [1] : vector<8x32xf32> to vector<8xf32>
    %402 = vector.shape_cast %401 : vector<8xf32> to vector<8x1xf32>
    %cst_159 = arith.constant 3.200000e+01 : f32
    %403 = vector.broadcast %cst_159 : f32 to vector<8x1xf32>
    %404 = arith.divf %402, %403 : vector<8x1xf32>
    %405 = vector.broadcast %404 : vector<8x1xf32> to vector<8x32xf32>
    %406 = arith.subf %397, %405 : vector<8x32xf32>
    %407 = arith.mulf %406, %406 : vector<8x32xf32>
    %cst_160 = arith.constant dense<0.000000e+00> : vector<8xf32>
    %408 = vector.multi_reduction <add>, %407, %cst_160 [1] : vector<8x32xf32> to vector<8xf32>
    %409 = vector.shape_cast %408 : vector<8xf32> to vector<8x1xf32>
    %cst_161 = arith.constant 3.200000e+01 : f32
    %410 = vector.broadcast %cst_161 : f32 to vector<8x1xf32>
    %411 = arith.divf %409, %410 : vector<8x1xf32>
    %412 = vector.broadcast %404 : vector<8x1xf32> to vector<8x32xf32>
    %413 = arith.subf %397, %412 : vector<8x32xf32>
    %cst_162 = arith.constant 9.99999974E-6 : f32
    %414 = vector.broadcast %cst_162 : f32 to vector<8x1xf32>
    %415 = arith.addf %411, %414 : vector<8x1xf32>
    %416 = math.rsqrt %415 : vector<8x1xf32>
    %417 = vector.broadcast %416 : vector<8x1xf32> to vector<8x32xf32>
    %418 = arith.mulf %413, %417 : vector<8x32xf32>
    %419 = vector.broadcast %399 : vector<1x32xf32> to vector<8x32xf32>
    %420 = arith.mulf %418, %419 : vector<8x32xf32>
    %421 = vector.broadcast %400 : vector<1x32xf32> to vector<8x32xf32>
    %422 = arith.addf %420, %421 : vector<8x32xf32>
    %c0_163 = arith.constant 0 : index
    %c0_164 = arith.constant 0 : index
    %c0_165 = arith.constant 0 : index
    %423 = vector.load %arg11[%c0_163, %c0_164, %c0_165] : memref<1x8x32xf32, #tpu.memory_space<vmem>>, vector<1x8x32xf32>
    %424 = vector.shape_cast %423 : vector<1x8x32xf32> to vector<8x32xf32>
    %425 = vector.shape_cast %422 : vector<8x32xf32> to vector<1x8x32xf32>
    tpu.vector_store %arg11[%c0_163, %c0_164, %c0_165], %425 {strides = array<i32>} : memref<1x8x32xf32, #tpu.memory_space<vmem>>, vector<1x8x32xf32>,
    return
  }
  func.func @transform_0(%arg0: i32) -> (i32, i32, i32) {
    %c0_i32 = arith.constant 0 : i32
    %c0_i32_0 = arith.constant 0 : i32
    %c0_i32_1 = arith.constant 0 : i32
    return %arg0, %c0_i32, %c0_i32_0 : i32, i32, i32
  }
  func.func @transform_1(%arg0: i32) -> (i32, i32, i32) {
    %c0_i32 = arith.constant 0 : i32
    %c0_i32_0 = arith.constant 0 : i32
    %c0_i32_1 = arith.constant 0 : i32
    return %arg0, %c0_i32, %c0_i32_0 : i32, i32, i32
  }
  func.func @transform_2(%arg0: i32) -> (i32, i32) {
    %c0_i32 = arith.constant 0 : i32
    %c0_i32_0 = arith.constant 0 : i32
    %c0_i32_1 = arith.constant 0 : i32
    return %c0_i32, %c0_i32_0 : i32, i32
  }
  func.func @transform_3(%arg0: i32) -> (i32, i32, i32) {
    %c0_i32 = arith.constant 0 : i32
    %c0_i32_0 = arith.constant 0 : i32
    %c0_i32_1 = arith.constant 0 : i32
    %c0_i32_2 = arith.constant 0 : i32
    return %c0_i32, %c0_i32_0, %c0_i32_1 : i32, i32, i32
  }
  func.func @transform_4(%arg0: i32) -> (i32, i32, i32) {
    %c0_i32 = arith.constant 0 : i32
    %c0_i32_0 = arith.constant 0 : i32
    %c0_i32_1 = arith.constant 0 : i32
    %c0_i32_2 = arith.constant 0 : i32
    return %c0_i32, %c0_i32_0, %c0_i32_1 : i32, i32, i32
  }
  func.func @transform_5(%arg0: i32) -> (i32, i32, i32) {
    %c0_i32 = arith.constant 0 : i32
    %c0_i32_0 = arith.constant 0 : i32
    %c0_i32_1 = arith.constant 0 : i32
    %c0_i32_2 = arith.constant 0 : i32
    return %c0_i32, %c0_i32_0, %c0_i32_1 : i32, i32, i32
  }
  func.func @transform_6(%arg0: i32) -> (i32, i32, i32) {
    %c0_i32 = arith.constant 0 : i32
    %c0_i32_0 = arith.constant 0 : i32
    %c0_i32_1 = arith.constant 0 : i32
    %c0_i32_2 = arith.constant 0 : i32
    return %c0_i32, %c0_i32_0, %c0_i32_1 : i32, i32, i32
  }
  func.func @transform_7(%arg0: i32) -> (i32, i32, i32) {
    %c0_i32 = arith.constant 0 : i32
    %c0_i32_0 = arith.constant 0 : i32
    %c0_i32_1 = arith.constant 0 : i32
    %c0_i32_2 = arith.constant 0 : i32
    return %c0_i32, %c0_i32_0, %c0_i32_1 : i32, i32, i32
  }
  func.func @transform_8(%arg0: i32) -> (i32, i32, i32) {
    %c0_i32 = arith.constant 0 : i32
    %c0_i32_0 = arith.constant 0 : i32
    %c0_i32_1 = arith.constant 0 : i32
    %c0_i32_2 = arith.constant 0 : i32
    return %c0_i32, %c0_i32_0, %c0_i32_1 : i32, i32, i32
  }
  func.func @transform_9(%arg0: i32) -> (i32, i32) {
    %c0_i32 = arith.constant 0 : i32
    %c0_i32_0 = arith.constant 0 : i32
    %c0_i32_1 = arith.constant 0 : i32
    return %c0_i32, %c0_i32_0 : i32, i32
  }
  func.func @transform_10(%arg0: i32) -> (i32, i32, i32) {
    %c0_i32 = arith.constant 0 : i32
    %c0_i32_0 = arith.constant 0 : i32
    %c0_i32_1 = arith.constant 0 : i32
    return %arg0, %c0_i32, %c0_i32_0 : i32, i32, i32
  }
}

</mosaic_0001>

<llo_original>
// kernel: tpu_custom_call.1
$region0: #{tpu_custom_call.1}
  #allocation0 [shape = 'u32[]', space=smem, size = 0x4, offset = 0x4, fixed_abs, tag = 'smem constant byte address 0x4 - core index']
  #allocation1 [shape = 'u32[72,128]{1,0:T(1,128)}', space=vmem, size = 0x9000, scoped, tag = 'internal scratch']
  #allocation2 [shape = 'f32[8,32]{1,0:T(8,128)}', space=vmem, size = 0x1000, scoped, tag = 'scratch operand']
  %s0 = inlined_call_operand.hbm [shape: f32[2,8,32], index: 0, kind: input, shape index: {}]
  %s1 = inlined_call_operand.vmem [shape: f32[2,8,1], index: 1, kind: input, shape index: {}]
  %s2 = inlined_call_operand.vmem [shape: f32[8,32], index: 2, kind: input, shape index: {}]
  %s3 = inlined_call_operand.vmem [shape: f32[2,32,96], index: 3, kind: input, shape index: {}]
  %s4 = inlined_call_operand.vmem [shape: f32[2,32,32], index: 4, kind: input, shape index: {}]
  %s5 = inlined_call_operand.vmem [shape: f32[2,32,64], index: 5, kind: input, shape index: {}]
  %s6 = inlined_call_operand.vmem [shape: f32[2,1,64], index: 6, kind: input, shape index: {}]
  %s7 = inlined_call_operand.vmem [shape: f32[2,64,32], index: 7, kind: input, shape index: {}]
  %s8 = inlined_call_operand.vmem [shape: f32[2,9,32], index: 8, kind: input, shape index: {}]
  %s9 = inlined_call_operand.vmem [shape: f32[2,32], index: 9, kind: input, shape index: {}]
  %s10 = inlined_call_operand.hbm [shape: f32[2,8,32], index: 10, kind: output, shape index: {}]
  %s11 = sld [smem:[#allocation0]]
  $region77: #{tpu_custom_call.1} parent=0
    _
  %s13 = ssub.s32 1, %s11
  %s14 = scalar_select 0, %s13, %s11
  $region1: #{tpu_custom_call.1} parent=0
    #allocation3 [shape = 'u8[8192]{0}', space=vmem, size = 0x2000, scoped, tag = 'input window, operand 0']
    #allocation4 [shape = 's32[2]{0}', space=sflag, size = 0x8, scoped, tag = 'scoped memory for tpu_custom_call.1']
    #allocation5 [shape = 's32[2]{0}', space=sflag, size = 0x8, scoped, tag = 'scoped memory for tpu_custom_call.1']
    #allocation6 [shape = 'u8[8192]{0}', space=vmem, size = 0x2000, scoped, tag = 'output window, operand 0']
    %15 = vsyncpa [#allocation4], 0
    %s16 = scalar_lea.sflag [#allocation4], 1
    %17 = vsyncpa %s16, 0
    %18 = vsyncpa [#allocation5], 0
    %s19 = scalar_lea.sflag [#allocation5], 1
    %20 = vsyncpa %s19, 0
    loop: start=0, step=1, limit=4
    $region2: #{tpu_custom_call.1} parent=1 // loop_pre_header
      _
    $region3: #{tpu_custom_call.1} parent=1 // loop_header
      %s22 = sphi 0, %s26
      %p23 = scmp.ge.s32.totalorder %s22, 4
      %s32 = sphi 0, %s34
      %s35 = sphi 0, %s32
      %s36 = sphi 0, %s35
      %s52 = sphi 0, %s36
      %s58 = sphi 0, %s60
      %s61 = sphi 0, %s58
      %s62 = sphi 0, %s61
      %s78 = sphi 0, %s62
      %s82 = sphi 0, %s82
      %s84 = sphi 0, %s82
      %s85 = sphi 0, %s84
      %s99 = sphi 0, %s85
      %s103 = sphi 0, %s103
      %s105 = sphi 0, %s103
      %s106 = sphi 0, %s105
      %s120 = sphi 0, %s106
      %s124 = sphi 0, %s124
      %s126 = sphi 0, %s124
      %s127 = sphi 0, %s126
      %s141 = sphi 0, %s127
      %s145 = sphi 0, %s145
      %s147 = sphi 0, %s145
      %s148 = sphi 0, %s147
      %s162 = sphi 0, %s148
      %s166 = sphi 0, %s166
      %s168 = sphi 0, %s166
      %s169 = sphi 0, %s168
      %s183 = sphi 0, %s169
      %s187 = sphi 0, %s187
      %s189 = sphi 0, %s187
      %s190 = sphi 0, %s189
      %s204 = sphi 0, %s190
      %s208 = sphi 0, %s208
      %s210 = sphi 0, %s208
      %s211 = sphi 0, %s210
      %s225 = sphi 0, %s211
      %s229 = sphi 0, %s229
      %s231 = sphi 0, %s229
      %s232 = sphi 0, %s231
      %s246 = sphi 0, %s232
      %s252 = sphi 0, %s254
      %s255 = sphi 0, %s252
      %s256 = sphi 0, %s255
      %s272 = sphi 0, %s256
    $region4: #{tpu_custom_call.1} parent=1 // loop_header_branch
      %25 = sbr.rel (%p23) target = $region8
    $region5: #{tpu_custom_call.1} parent=1 // loop_body
      %s27 = ssub.s32 %s22, 1
      %s28 = ssub.s32 %s22, 2
      %s29 = sadd.s32 %s22, 1
      %s30 = ssub.s32 %s22, %s29
      %p31 = scmp.eq.s32.totalorder %s30, 0
      %s33 = sadd.s32 %s32, 1
      %s34 = scalar_select %p31, %s32, %s33
      %p37 = pneg %p31
      %p38 = scmp.eq.s32.totalorder %s22, 1
      %p39 = por %p37, %p38
      %p40 = scmp.ne.s32.totalorder %s32, %s35
      %p41 = scmp.eq.s32.totalorder %s22, 0
      %p42 = por %p40, %p41
      %p43 = scmp.ne.s32.totalorder %s32, %s35
      %p44 = scmp.eq.s32.totalorder %s27, 1
      %p45 = por %p43, %p44
      %p46 = scmp.ne.s32.totalorder %s35, %s36
      %p47 = scmp.eq.s32.totalorder %s27, 0
      %p48 = por %p46, %p47
      %p49 = scmp.ne.s32.totalorder %s35, %s36
      %p50 = scmp.eq.s32.totalorder %s28, 1
      %p51 = por %p49, %p50
      %p53 = scmp.ne.s32.totalorder %s36, %s52
      %p54 = scmp.eq.s32.totalorder %s28, 0
      %p55 = por %p53, %p54
      %s56 = ssub.s32 %s22, %s29
      %p57 = scmp.eq.s32.totalorder %s56, 0
      %s59 = sadd.s32 %s58, 1
      %s60 = scalar_select %p57, %s58, %s59
      %p63 = pneg %p57
      %p64 = scmp.eq.s32.totalorder %s22, 1
      %p65 = por %p63, %p64
      %p66 = scmp.ne.s32.totalorder %s58, %s61
      %p67 = scmp.eq.s32.totalorder %s22, 0
      %p68 = por %p66, %p67
      %p69 = scmp.ne.s32.totalorder %s58, %s61
      %p70 = scmp.eq.s32.totalorder %s27, 1
      %p71 = por %p69, %p70
      %p72 = scmp.ne.s32.totalorder %s61, %s62
      %p73 = scmp.eq.s32.totalorder %s27, 0
      %p74 = por %p72, %p73
      %p75 = scmp.ne.s32.totalorder %s61, %s62
      %p76 = scmp.eq.s32.totalorder %s28, 1
      %p77 = por %p75, %p76
      %p79 = scmp.ne.s32.totalorder %s62, %s78
      %p80 = scmp.eq.s32.totalorder %s28, 0
      %p81 = por %p79, %p80
      %s83 = sadd.s32 %s82, 1
      %p86 = scmp.eq.s32.totalorder %s22, 1
      %p87 = scmp.ne.s32.totalorder %s82, %s84
      %p88 = scmp.eq.s32.totalorder %s22, 0
      %p89 = por %p87, %p88
      %p90 = scmp.ne.s32.totalorder %s82, %s84
      %p91 = scmp.eq.s32.totalorder %s27, 1
      %p92 = por %p90, %p91
      %p93 = scmp.ne.s32.totalorder %s84, %s85
      %p94 = scmp.eq.s32.totalorder %s27, 0
      %p95 = por %p93, %p94
      %p96 = scmp.ne.s32.totalorder %s84, %s85
      %p97 = scmp.eq.s32.totalorder %s28, 1
      %p98 = por %p96, %p97
      %p100 = scmp.ne.s32.totalorder %s85, %s99
      %p101 = scmp.eq.s32.totalorder %s28, 0
      %p102 = por %p100, %p101
      %s104 = sadd.s32 %s103, 1
      %p107 = scmp.eq.s32.totalorder %s22, 1
      %p108 = scmp.ne.s32.totalorder %s103, %s105
      %p109 = scmp.eq.s32.totalorder %s22, 0
      %p110 = por %p108, %p109
      %p111 = scmp.ne.s32.totalorder %s103, %s105
      %p112 = scmp.eq.s32.totalorder %s27, 1
      %p113 = por %p111, %p112
      %p114 = scmp.ne.s32.totalorder %s105, %s106
      %p115 = scmp.eq.s32.totalorder %s27, 0
      %p116 = por %p114, %p115
      %p117 = scmp.ne.s32.totalorder %s105, %s106
      %p118 = scmp.eq.s32.totalorder %s28, 1
      %p119 = por %p117, %p118
      %p121 = scmp.ne.s32.totalorder %s106, %s120
      %p122 = scmp.eq.s32.totalorder %s28, 0
      %p123 = por %p121, %p122
      %s125 = sadd.s32 %s124, 1
      %p128 = scmp.eq.s32.totalorder %s22, 1
      %p129 = scmp.ne.s32.totalorder %s124, %s126
      %p130 = scmp.eq.s32.totalorder %s22, 0
      %p131 = por %p129, %p130
      %p132 = scmp.ne.s32.totalorder %s124, %s126
      %p133 = scmp.eq.s32.totalorder %s27, 1
      %p134 = por %p132, %p133
      %p135 = scmp.ne.s32.totalorder %s126, %s127
      %p136 = scmp.eq.s32.totalorder %s27, 0
      %p137 = por %p135, %p136
      %p138 = scmp.ne.s32.totalorder %s126, %s127
      %p139 = scmp.eq.s32.totalorder %s28, 1
      %p140 = por %p138, %p139
      %p142 = scmp.ne.s32.totalorder %s127, %s141
      %p143 = scmp.eq.s32.totalorder %s28, 0
      %p144 = por %p142, %p143
      %s146 = sadd.s32 %s145, 1
      %p149 = scmp.eq.s32.totalorder %s22, 1
      %p150 = scmp.ne.s32.totalorder %s145, %s147
      %p151 = scmp.eq.s32.totalorder %s22, 0
      %p152 = por %p150, %p151
      %p153 = scmp.ne.s32.totalorder %s145, %s147
      %p154 = scmp.eq.s32.totalorder %s27, 1
      %p155 = por %p153, %p154
      %p156 = scmp.ne.s32.totalorder %s147, %s148
      %p157 = scmp.eq.s32.totalorder %s27, 0
      %p158 = por %p156, %p157
      %p159 = scmp.ne.s32.totalorder %s147, %s148
      %p160 = scmp.eq.s32.totalorder %s28, 1
      %p161 = por %p159, %p160
      %p163 = scmp.ne.s32.totalorder %s148, %s162
      %p164 = scmp.eq.s32.totalorder %s28, 0
      %p165 = por %p163, %p164
      %s167 = sadd.s32 %s166, 1
      %p170 = scmp.eq.s32.totalorder %s22, 1
      %p171 = scmp.ne.s32.totalorder %s166, %s168
      %p172 = scmp.eq.s32.totalorder %s22, 0
      %p173 = por %p171, %p172
      %p174 = scmp.ne.s32.totalorder %s166, %s168
      %p175 = scmp.eq.s32.totalorder %s27, 1
      %p176 = por %p174, %p175
      %p177 = scmp.ne.s32.totalorder %s168, %s169
      %p178 = scmp.eq.s32.totalorder %s27, 0
      %p179 = por %p177, %p178
      %p180 = scmp.ne.s32.totalorder %s168, %s169
      %p181 = scmp.eq.s32.totalorder %s28, 1
      %p182 = por %p180, %p181
      %p184 = scmp.ne.s32.totalorder %s169, %s183
      %p185 = scmp.eq.s32.totalorder %s28, 0
      %p186 = por %p184, %p185
      %s188 = sadd.s32 %s187, 1
      %p191 = scmp.eq.s32.totalorder %s22, 1
      %p192 = scmp.ne.s32.totalorder %s187, %s189
      %p193 = scmp.eq.s32.totalorder %s22, 0
      %p194 = por %p192, %p193
      %p195 = scmp.ne.s32.totalorder %s187, %s189
      %p196 = scmp.eq.s32.totalorder %s27, 1
      %p197 = por %p195, %p196
      %p198 = scmp.ne.s32.totalorder %s189, %s190
      %p199 = scmp.eq.s32.totalorder %s27, 0
      %p200 = por %p198, %p199
      %p201 = scmp.ne.s32.totalorder %s189, %s190
      %p202 = scmp.eq.s32.totalorder %s28, 1
      %p203 = por %p201, %p202
      %p205 = scmp.ne.s32.totalorder %s190, %s204
      %p206 = scmp.eq.s32.totalorder %s28, 0
      %p207 = por %p205, %p206
      %s209 = sadd.s32 %s208, 1
      %p212 = scmp.eq.s32.totalorder %s22, 1
      %p213 = scmp.ne.s32.totalorder %s208, %s210
      %p214 = scmp.eq.s32.totalorder %s22, 0
      %p215 = por %p213, %p214
      %p216 = scmp.ne.s32.totalorder %s208, %s210
      %p217 = scmp.eq.s32.totalorder %s27, 1
      %p218 = por %p216, %p217
      %p219 = scmp.ne.s32.totalorder %s210, %s211
      %p220 = scmp.eq.s32.totalorder %s27, 0
      %p221 = por %p219, %p220
      %p222 = scmp.ne.s32.totalorder %s210, %s211
      %p223 = scmp.eq.s32.totalorder %s28, 1
      %p224 = por %p222, %p223
      %p226 = scmp.ne.s32.totalorder %s211, %s225
      %p227 = scmp.eq.s32.totalorder %s28, 0
      %p228 = por %p226, %p227
      %s230 = sadd.s32 %s229, 1
      %p233 = scmp.eq.s32.totalorder %s22, 1
      %p234 = scmp.ne.s32.totalorder %s229, %s231
      %p235 = scmp.eq.s32.totalorder %s22, 0
      %p236 = por %p234, %p235
      %p237 = scmp.ne.s32.totalorder %s229, %s231
      %p238 = scmp.eq.s32.totalorder %s27, 1
      %p239 = por %p237, %p238
      %p240 = scmp.ne.s32.totalorder %s231, %s232
      %p241 = scmp.eq.s32.totalorder %s27, 0
      %p242 = por %p240, %p241
      %p243 = scmp.ne.s32.totalorder %s231, %s232
      %p244 = scmp.eq.s32.totalorder %s28, 1
      %p245 = por %p243, %p244
      %p247 = scmp.ne.s32.totalorder %s232, %s246
      %p248 = scmp.eq.s32.totalorder %s28, 0
      %p249 = por %p247, %p248
      %s250 = ssub.s32 %s22, %s29
      %p251 = scmp.eq.s32.totalorder %s250, 0
      %s253 = sadd.s32 %s252, 1
      %s254 = scalar_select %p251, %s252, %s253
      %p257 = pneg %p251
      %p258 = scmp.eq.s32.totalorder %s22, 1
      %p259 = por %p257, %p258
      %p260 = scmp.ne.s32.totalorder %s252, %s255
      %p261 = scmp.eq.s32.totalorder %s22, 0
      %p262 = por %p260, %p261
      %p263 = scmp.ne.s32.totalorder %s252, %s255
      %p264 = scmp.eq.s32.totalorder %s27, 1
      %p265 = por %p263, %p264
      %p266 = scmp.ne.s32.totalorder %s255, %s256
      %p267 = scmp.eq.s32.totalorder %s27, 0
      %p268 = por %p266, %p267
      %p269 = scmp.ne.s32.totalorder %s255, %s256
      %p270 = scmp.eq.s32.totalorder %s28, 1
      %p271 = por %p269, %p270
      %p273 = scmp.ne.s32.totalorder %s256, %s272
      %p274 = scmp.eq.s32.totalorder %s28, 0
      %p275 = por %p273, %p274
      %p276 = scmp.le.s32.totalorder 1, %s22
      %p277 = scmp.lt.s32.totalorder %s22, 3
      %p278 = pnand %p276, %p277
      %p279 = pneg %p278
      // Predicated region
      $region9: #{tpu_custom_call.1} parent=5 // pred_check
        _
      $region10: #{tpu_custom_call.1} parent=5 // pred_check_branch
        %281 = sbr.rel (%p278) target = $region12
      $region11: #{tpu_custom_call.1} parent=5 // pred_region
        %s282 = ssub.s32 %s22, 1
        // Predicated region
        $region13: #{tpu_custom_call.1} parent=11 // pred_check
          %p283 = pneg %p95
        $region14: #{tpu_custom_call.1} parent=11 // pred_check_branch
          %285 = sbr.rel (%p283) target = $region16
        $region15: #{tpu_custom_call.1} parent=11 // pred_region
          _
        $region16: #{tpu_custom_call.1} parent=11 // pred_fallthru
          _
        // Predicated region
        $region17: #{tpu_custom_call.1} parent=11 // pred_check
          %p286 = pneg %p116
        $region18: #{tpu_custom_call.1} parent=11 // pred_check_branch
          %288 = sbr.rel (%p286) target = $region20
        $region19: #{tpu_custom_call.1} parent=11 // pred_region
          _
        $region20: #{tpu_custom_call.1} parent=11 // pred_fallthru
          _
        // Predicated region
        $region21: #{tpu_custom_call.1} parent=11 // pred_check
          %p289 = pneg %p137
        $region22: #{tpu_custom_call.1} parent=11 // pred_check_branch
          %291 = sbr.rel (%p289) target = $region24
        $region23: #{tpu_custom_call.1} parent=11 // pred_region
          _
        $region24: #{tpu_custom_call.1} parent=11 // pred_fallthru
          _
        // Predicated region
        $region25: #{tpu_custom_call.1} parent=11 // pred_check
          %p292 = pneg %p158
        $region26: #{tpu_custom_call.1} parent=11 // pred_check_branch
          %294 = sbr.rel (%p292) target = $region28
        $region27: #{tpu_custom_call.1} parent=11 // pred_region
          _
        $region28: #{tpu_custom_call.1} parent=11 // pred_fallthru
          _
        // Predicated region
        $region29: #{tpu_custom_call.1} parent=11 // pred_check
          %p295 = pneg %p179
        $region30: #{tpu_custom_call.1} parent=11 // pred_check_branch
          %297 = sbr.rel (%p295) target = $region32
        $region31: #{tpu_custom_call.1} parent=11 // pred_region
          _
        $region32: #{tpu_custom_call.1} parent=11 // pred_fallthru
          _
        // Predicated region
        $region33: #{tpu_custom_call.1} parent=11 // pred_check
          %p298 = pneg %p200
        $region34: #{tpu_custom_call.1} parent=11 // pred_check_branch
          %300 = sbr.rel (%p298) target = $region36
        $region35: #{tpu_custom_call.1} parent=11 // pred_region
          _
        $region36: #{tpu_custom_call.1} parent=11 // pred_fallthru
          _
        // Predicated region
        $region37: #{tpu_custom_call.1} parent=11 // pred_check
          %p301 = pneg %p221
        $region38: #{tpu_custom_call.1} parent=11 // pred_check_branch
          %303 = sbr.rel (%p301) target = $region40
        $region39: #{tpu_custom_call.1} parent=11 // pred_region
          _
        $region40: #{tpu_custom_call.1} parent=11 // pred_fallthru
          _
        // Predicated region
        $region41: #{tpu_custom_call.1} parent=11 // pred_check
          %p304 = pneg %p242
        $region42: #{tpu_custom_call.1} parent=11 // pred_check_branch
          %306 = sbr.rel (%p304) target = $region44
        $region43: #{tpu_custom_call.1} parent=11 // pred_region
          _
        $region44: #{tpu_custom_call.1} parent=11 // pred_fallthru
          _
      $region12: #{tpu_custom_call.1} parent=5 // pred_fallthru
        _
      %p307 = scmp.lt.s32.totalorder %s22, 2
      // Predicated region
      $region45: #{tpu_custom_call.1} parent=5 // pred_check
        %p308 = pneg %p307
      $region46: #{tpu_custom_call.1} parent=5 // pred_check_branch
        %310 = sbr.rel (%p308) target = $region48
      $region47: #{tpu_custom_call.1} parent=5 // pred_region
        // Predicated region
        $region49: #{tpu_custom_call.1} parent=47 // pred_check
          %p311 = pneg %p42
        $region50: #{tpu_custom_call.1} parent=47 // pred_check_branch
          %313 = sbr.rel (%p311) target = $region52
        $region51: #{tpu_custom_call.1} parent=47 // pred_region
          %s314 = sand.u32 %s32, 1
          %s315 = scalar_lea.sflag [#allocation4], %s314
          %s316 = sand.u32 %s32, 1
          %s317 = smul.addr %s316, 8
          %s318 = scalar_lea.vmem [#allocation3], %s317
          %320 = vsyncadd %s315, 0
          %s321 = smul.addr %s22, 8
          %s322 = scalar_lea.hbm %s0, %s321
          %s324 = sshll.u32 %s322, 4
          %s325 = int_to_ptr.hbm [resolvable:$true] %s324
          %s326 = sshll.u32 %s318, 4
          %s327 = int_to_ptr.vmem [resolvable:$true] %s326
          %329 = dma.hbm_to_vmem [thread:$0]  %s325, 128, %s327, %s315
        $region52: #{tpu_custom_call.1} parent=47 // pred_fallthru
          _
        // Predicated region
        $region53: #{tpu_custom_call.1} parent=47 // pred_check
          %p330 = pneg %p68
        $region54: #{tpu_custom_call.1} parent=47 // pred_check_branch
          %332 = sbr.rel (%p330) target = $region56
        $region55: #{tpu_custom_call.1} parent=47 // pred_region
          %p333 = scmp.lt.s32.totalorder %s22, 1
          %s334 = scalar_select %p333, %s22, 1
          %s335 = smul.addr %s334, 8
          %s336 = scalar_lea.vmem %s1, %s335
        $region56: #{tpu_custom_call.1} parent=47 // pred_fallthru
          _
      $region48: #{tpu_custom_call.1} parent=5 // pred_fallthru
        _
      %p337 = scmp.le.s32.totalorder 1, %s22
      %p338 = scmp.lt.s32.totalorder %s22, 3
      %p339 = pnand %p337, %p338
      %p340 = pneg %p339
      // Predicated region
      $region57: #{tpu_custom_call.1} parent=5 // pred_check
        _
      $region58: #{tpu_custom_call.1} parent=5 // pred_check_branch
        %342 = sbr.rel (%p339) target = $region60
      $region59: #{tpu_custom_call.1} parent=5 // pred_region
        %s343 = ssub.s32 %s22, 1
        %s344 = sand.u32 %s35, 1
        %s345 = scalar_lea.sflag [#allocation4], %s344
        %s346 = sand.u32 %s35, 1
        %s347 = smul.addr %s346, 8
        %s348 = scalar_lea.vmem [#allocation3], %s347
        // Predicated region
        $region61: #{tpu_custom_call.1} parent=59 // pred_check
          %p349 = pneg %p48
        $region62: #{tpu_custom_call.1} parent=59 // pred_check_branch
          %351 = sbr.rel (%p349) target = $region64
        $region63: #{tpu_custom_call.1} parent=59 // pred_region
          %353 = dma.done %s345, 128
        $region64: #{tpu_custom_call.1} parent=59 // pred_fallthru
          _
        %s354 = sand.u32 %s35, 1
        %s355 = scalar_lea.sflag [#allocation4], %s354
        %s356 = sand.u32 %s35, 1
        %s357 = smul.addr %s356, 8
        %s358 = scalar_lea.vmem [#allocation3], %s357
        %p359 = pneg %p48
        %p360 = pneg %p45
        %p361 = scmp.lt.s32.totalorder %s27, 1
        %s362 = scalar_select %p361, %s27, 1
        %s363 = smul.addr %s362, 8
        %s364 = scalar_lea.vmem %s1, %s363
        %p365 = pneg %p74
        %p366 = pneg %p71
        %p367 = pneg %p95
        %p368 = pneg %p92
        %p369 = pneg %p116
        %p370 = pneg %p113
        %p371 = pneg %p137
        %p372 = pneg %p134
        %p373 = pneg %p158
        %p374 = pneg %p155
        %p375 = pneg %p179
        %p376 = pneg %p176
        %p377 = pneg %p200
        %p378 = pneg %p197
        %p379 = pneg %p221
        %p380 = pneg %p218
        %p381 = pneg %p242
        %p382 = pneg %p239
        %p383 = pneg %p268
        %p384 = pneg %p265
        %s385 = sand.u32 %s255, 1
        %s386 = scalar_lea.sflag [#allocation5], %s385
        %s387 = sand.u32 %s255, 1
        %s388 = smul.addr %s387, 8
        %s389 = scalar_lea.vmem [#allocation6], %s388
        %p390 = scmp.lt.s32.totalorder %s27, 1
        %s391 = scalar_select %p390, %s27, 1
        %s392 = smul.addr %s391, 8
        %s393 = scalar_lea.vmem %s1, %s392
        %v394 = vld [vmem:[%s348] sm:$0xff]
        %v395 = vld [vmem:[%s393] sm:$0xff]
        %397 = vset.pattern.permute.xlu0 0
        %398 = vperm.xlu0 %397, %v395
        %v399 = vpop.permute.xlu0 %398
        %v401 = vmul.f32 %v394, %v399
        %v402 = vld [vmem:[%s2] sm:$0xff]
        %v403 = vadd.f32 %v401, %v402
        %v404 = vld [vmem:[%s8] sm:$0xff]
        %v405 = vld [vmem:[%s8 + $0x8] sm:$0x1]
        %v406 = vld [vmem:[%s3] sm:$0xff]
        %v407 = vld [vmem:[%s3 + $0x8] sm:$0xff]
        %v408 = vld [vmem:[%s3 + $0x10] sm:$0xff]
        %v409 = vld [vmem:[%s3 + $0x18] sm:$0xff]
        %vm410 = vcmask 261120
        %v412 = vsel %vm410, %v403, 0
        %414 = vmatpush.msra.mxu0 0.0
        %415 = vmatpush.msra.mxu0 0.0
        %416 = vmatpush.msra.mxu0 0.0
        %417 = vmatpush.msra.mxu0 0.0
        %418 = vmatpush.msra.mxu0 0.0
        %419 = vmatpush.msra.mxu0 0.0
        %420 = vmatpush.msra.mxu0 0.0
        %421 = vmatpush.msra.mxu0 0.0
        %422 = vmatpush.msra.mxu0 0.0
        %423 = vmatpush.msra.mxu0 0.0
        %424 = vmatpush.msra.mxu0 0.0
        %425 = vmatpush.msra.mxu0 0.0
        %426 = vmatpush.msra.mxu0 %v409
        %427 = vmatpush.msra.mxu0 %v408
        %428 = vmatpush.msra.mxu0 %v407
        %429 = vmatpush.msra.mxu0 %v406
        %430 = vmatmul.f32.gmra.mxu0 %v412
        %v431 = vpop.f32.mrf.mxu0
        %v432 = vadd.f32 0.0, %v431
        %433 = vdwg.mxu0
        %v434 = vperm.slane %v404, 0
        %v435 = vadd.f32 %v432, %v434
        %v436 = vperm.slane %v404, 1
        %438 = vrot.lane.b32.xlu0 %v436, 32
        %v439 = vpop.permute.xlu0 %438
        %v441 = vadd.f32 %v432, %v439
        %v442 = vperm.slane %v404, 2
        %444 = vrot.lane.b32.xlu0 %v442, 64
        %v445 = vpop.permute.xlu0 %444
        %v447 = vadd.f32 %v432, %v445
        %449 = vrot.lane.b32.xlu0 %v441, 96
        %v450 = vpop.permute.xlu0 %449
        %vm451 = vcmask 64512
        %v453 = vsel %vm451, %v435, 0
        %v455 = vsel %vm451, %v450, 0
        %457 = vmatpush.xpose.msra.mxu0 0.0
        %458 = vmatpush.xpose.msra.mxu0 0.0
        %459 = vmatpush.xpose.msra.mxu0 0.0
        %460 = vmatpush.xpose.msra.mxu0 0.0
        %461 = vmatpush.xpose.msra.mxu0 0.0
        %462 = vmatpush.xpose.msra.mxu0 0.0
        %463 = vmatpush.xpose.msra.mxu0 0.0
        %464 = vmatpush.xpose.msra.mxu0 0.0
        %465 = vmatpush.xpose.msra.mxu0 0.0
        %466 = vmatpush.xpose.msra.mxu0 0.0
        %467 = vmatpush.xpose.msra.mxu0 0.0
        %468 = vmatpush.xpose.msra.mxu0 0.0
        %469 = vmatpush.xpose.msra.mxu0 0.0
        %470 = vmatpush.xpose.msra.mxu0 0.0
        %471 = vmatpush.xpose.msra.mxu0 0.0
        %472 = vmatpush.xpose.msra.mxu0 %v455
        %473 = vmatmul.f32.gmra.mxu0 %v453
        %v474 = vpop.f32.mrf.mxu0
        %v475 = vadd.f32 0.0, %v474
        %476 = vdwg.mxu0
        %v477 = vmul.f32 %v475, 0.35355338
        %v478 = vsel %vm451, %v477, -inf
        %479 = vmax.xlane.f32.xlu0 %v478
        %v480 = vpop.xlane.xlu0 %479
        %v481 = vsub.f32 %v477, %v480
        %v482 = vmul.f32 %v481, 1.442695
        %v483 = vpow.pop %v482
        %v484 = vsel %vm451, %v483, 0.0
        %485 = vadd.xlane.f32.xlu0 %v484
        %v486 = vpop.xlane.xlu0 %485
        %v487 = vrcp.pop %v486
        %v488 = vmul.f32 %v486, %v487
        %v489 = vsub.f32 1.0, %v488
        %v490 = vmul.f32 %v487, %v489
        %v491 = vadd.f32 %v487, %v490
        %vm492 = vweird.f32 %v486
        %vm493 = vweird.f32 %v487
        %vm494 = vmor %vm492, %vm493
        %v495 = vsel %vm494, %v487, %v491
        %v496 = vand.u32 2147483647, %v486
        %vm497 = vcmp.eq.f32.partialorder %v496, 8.507059e+37
        %v498 = vand.u32 %v486, 2147483648
        %v499 = vor.u32 1.1754944e-38, %v498
        %v500 = vsel %vm497, %v499, %v495
        %v501 = vmul.f32 %v483, %v500
        %503 = vrot.lane.b32.xlu0 %v447, 64
        %v504 = vpop.permute.xlu0 %503
        %v507 = vsel %vm451, %v501, 0
        %509 = vmatpush.msra.mxu0 0.0
        %510 = vmatpush.msra.mxu0 0.0
        %511 = vmatpush.msra.mxu0 0.0
        %512 = vmatpush.msra.mxu0 0.0
        %513 = vmatpush.msra.mxu0 0.0
        %514 = vmatpush.msra.mxu0 0.0
        %515 = vmatpush.msra.mxu0 0.0
        %516 = vmatpush.msra.mxu0 0.0
        %517 = vmatpush.msra.mxu0 0.0
        %518 = vmatpush.msra.mxu0 0.0
        %519 = vmatpush.msra.mxu0 0.0
        %520 = vmatpush.msra.mxu0 0.0
        %521 = vmatpush.msra.mxu0 0.0
        %522 = vmatpush.msra.mxu0 0.0
        %523 = vmatpush.msra.mxu0 0.0
        %524 = vmatpush.msra.mxu0 %v504
        %525 = vmatmul.f32.gmra.mxu0 %v507
        %v526 = vpop.f32.mrf.mxu0
        %v527 = vadd.f32 0.0, %v526
        %528 = vdwg.mxu0
        %529 = vst.msk [vmem:[#allocation2] sm:$0xff] %vm451, %v527
        %530 = vrot.lane.b32.xlu0 %v435, 120
        %v531 = vpop.permute.xlu0 %530
        %532 = vrot.lane.b32.xlu0 %v441, 88
        %v533 = vpop.permute.xlu0 %532
        %v534 = vsel %vm451, %v531, 0
        %v536 = vsel %vm451, %v533, 0
        %538 = vmatpush.xpose.msra.mxu0 0.0
        %539 = vmatpush.xpose.msra.mxu0 0.0
        %540 = vmatpush.xpose.msra.mxu0 0.0
        %541 = vmatpush.xpose.msra.mxu0 0.0
        %542 = vmatpush.xpose.msra.mxu0 0.0
        %543 = vmatpush.xpose.msra.mxu0 0.0
        %544 = vmatpush.xpose.msra.mxu0 0.0
        %545 = vmatpush.xpose.msra.mxu0 0.0
        %546 = vmatpush.xpose.msra.mxu0 0.0
        %547 = vmatpush.xpose.msra.mxu0 0.0
        %548 = vmatpush.xpose.msra.mxu0 0.0
        %549 = vmatpush.xpose.msra.mxu0 0.0
        %550 = vmatpush.xpose.msra.mxu0 0.0
        %551 = vmatpush.xpose.msra.mxu0 0.0
        %552 = vmatpush.xpose.msra.mxu0 0.0
        %553 = vmatpush.xpose.msra.mxu0 %v536
        %554 = vmatmul.f32.gmra.mxu0 %v534
        %v555 = vpop.f32.mrf.mxu0
        %v556 = vadd.f32 0.0, %v555
        %557 = vdwg.mxu0
        %v558 = vmul.f32 %v556, 0.35355338
        %v559 = vsel %vm451, %v558, -inf
        %560 = vmax.xlane.f32.xlu0 %v559
        %v561 = vpop.xlane.xlu0 %560
        %v562 = vsub.f32 %v558, %v561
        %v563 = vmul.f32 %v562, 1.442695
        %v564 = vpow.pop %v563
        %v565 = vsel %vm451, %v564, 0.0
        %566 = vadd.xlane.f32.xlu0 %v565
        %v567 = vpop.xlane.xlu0 %566
        %v568 = vrcp.pop %v567
        %v569 = vmul.f32 %v567, %v568
        %v570 = vsub.f32 1.0, %v569
        %v571 = vmul.f32 %v568, %v570
        %v572 = vadd.f32 %v568, %v571
        %vm573 = vweird.f32 %v567
        %vm574 = vweird.f32 %v568
        %vm575 = vmor %vm573, %vm574
        %v576 = vsel %vm575, %v568, %v572
        %v577 = vand.u32 2147483647, %v567
        %vm578 = vcmp.eq.f32.partialorder %v577, 8.507059e+37
        %v579 = vand.u32 %v567, 2147483648
        %v580 = vor.u32 1.1754944e-38, %v579
        %v581 = vsel %vm578, %v580, %v576
        %v582 = vmul.f32 %v564, %v581
        %583 = vrot.lane.b32.xlu0 %v447, 56
        %v584 = vpop.permute.xlu0 %583
        %v587 = vsel %vm451, %v582, 0
        %589 = vmatpush.msra.mxu0 0.0
        %590 = vmatpush.msra.mxu0 0.0
        %591 = vmatpush.msra.mxu0 0.0
        %592 = vmatpush.msra.mxu0 0.0
        %593 = vmatpush.msra.mxu0 0.0
        %594 = vmatpush.msra.mxu0 0.0
        %595 = vmatpush.msra.mxu0 0.0
        %596 = vmatpush.msra.mxu0 0.0
        %597 = vmatpush.msra.mxu0 0.0
        %598 = vmatpush.msra.mxu0 0.0
        %599 = vmatpush.msra.mxu0 0.0
        %600 = vmatpush.msra.mxu0 0.0
        %601 = vmatpush.msra.mxu0 0.0
        %602 = vmatpush.msra.mxu0 0.0
        %603 = vmatpush.msra.mxu0 0.0
        %604 = vmatpush.msra.mxu0 %v584
        %605 = vmatmul.f32.gmra.mxu0 %v587
        %v606 = vpop.f32.mrf.mxu0
        %v607 = vadd.f32 0.0, %v606
        %608 = vdwg.mxu0
        %610 = vrot.lane.b32.xlu0 %v607, 8
        %v611 = vpop.permute.xlu0 %610
        %vm613 = vcmask 130112
        %614 = vst.msk [vmem:[#allocation2] sm:$0xff] %vm613, %v611
        %615 = vrot.lane.b32.xlu0 %v435, 112
        %v616 = vpop.permute.xlu0 %615
        %617 = vrot.lane.b32.xlu0 %v441, 80
        %v618 = vpop.permute.xlu0 %617
        %v619 = vsel %vm451, %v616, 0
        %v621 = vsel %vm451, %v618, 0
        %623 = vmatpush.xpose.msra.mxu0 0.0
        %624 = vmatpush.xpose.msra.mxu0 0.0
        %625 = vmatpush.xpose.msra.mxu0 0.0
        %626 = vmatpush.xpose.msra.mxu0 0.0
        %627 = vmatpush.xpose.msra.mxu0 0.0
        %628 = vmatpush.xpose.msra.mxu0 0.0
        %629 = vmatpush.xpose.msra.mxu0 0.0
        %630 = vmatpush.xpose.msra.mxu0 0.0
        %631 = vmatpush.xpose.msra.mxu0 0.0
        %632 = vmatpush.xpose.msra.mxu0 0.0
        %633 = vmatpush.xpose.msra.mxu0 0.0
        %634 = vmatpush.xpose.msra.mxu0 0.0
        %635 = vmatpush.xpose.msra.mxu0 0.0
        %636 = vmatpush.xpose.msra.mxu0 0.0
        %637 = vmatpush.xpose.msra.mxu0 0.0
        %638 = vmatpush.xpose.msra.mxu0 %v621
        %639 = vmatmul.f32.gmra.mxu0 %v619
        %v640 = vpop.f32.mrf.mxu0
        %v641 = vadd.f32 0.0, %v640
        %642 = vdwg.mxu0
        %v643 = vmul.f32 %v641, 0.35355338
        %v644 = vsel %vm451, %v643, -inf
        %645 = vmax.xlane.f32.xlu0 %v644
        %v646 = vpop.xlane.xlu0 %645
        %v647 = vsub.f32 %v643, %v646
        %v648 = vmul.f32 %v647, 1.442695
        %v649 = vpow.pop %v648
        %v650 = vsel %vm451, %v649, 0.0
        %651 = vadd.xlane.f32.xlu0 %v650
        %v652 = vpop.xlane.xlu0 %651
        %v653 = vrcp.pop %v652
        %v654 = vmul.f32 %v652, %v653
        %v655 = vsub.f32 1.0, %v654
        %v656 = vmul.f32 %v653, %v655
        %v657 = vadd.f32 %v653, %v656
        %vm658 = vweird.f32 %v652
        %vm659 = vweird.f32 %v653
        %vm660 = vmor %vm658, %vm659
        %v661 = vsel %vm660, %v653, %v657
        %v662 = vand.u32 2147483647, %v652
        %vm663 = vcmp.eq.f32.partialorder %v662, 8.507059e+37
        %v664 = vand.u32 %v652, 2147483648
        %v665 = vor.u32 1.1754944e-38, %v664
        %v666 = vsel %vm663, %v665, %v661
        %v667 = vmul.f32 %v649, %v666
        %668 = vrot.lane.b32.xlu0 %v447, 48
        %v669 = vpop.permute.xlu0 %668
        %v672 = vsel %vm451, %v667, 0
        %674 = vmatpush.msra.mxu0 0.0
        %675 = vmatpush.msra.mxu0 0.0
        %676 = vmatpush.msra.mxu0 0.0
        %677 = vmatpush.msra.mxu0 0.0
        %678 = vmatpush.msra.mxu0 0.0
        %679 = vmatpush.msra.mxu0 0.0
        %680 = vmatpush.msra.mxu0 0.0
        %681 = vmatpush.msra.mxu0 0.0
        %682 = vmatpush.msra.mxu0 0.0
        %683 = vmatpush.msra.mxu0 0.0
        %684 = vmatpush.msra.mxu0 0.0
        %685 = vmatpush.msra.mxu0 0.0
        %686 = vmatpush.msra.mxu0 0.0
        %687 = vmatpush.msra.mxu0 0.0
        %688 = vmatpush.msra.mxu0 0.0
        %689 = vmatpush.msra.mxu0 %v669
        %690 = vmatmul.f32.gmra.mxu0 %v672
        %v691 = vpop.f32.mrf.mxu0
        %v692 = vadd.f32 0.0, %v691
        %693 = vdwg.mxu0
        %695 = vrot.lane.b32.xlu0 %v692, 16
        %v696 = vpop.permute.xlu0 %695
        %vm698 = vcmask 195712
        %699 = vst.msk [vmem:[#allocation2] sm:$0xff] %vm698, %v696
        %700 = vrot.lane.b32.xlu0 %v435, 104
        %v701 = vpop.permute.xlu0 %700
        %702 = vrot.lane.b32.xlu0 %v441, 72
        %v703 = vpop.permute.xlu0 %702
        %v704 = vsel %vm451, %v701, 0
        %v706 = vsel %vm451, %v703, 0
        %708 = vmatpush.xpose.msra.mxu0 0.0
        %709 = vmatpush.xpose.msra.mxu0 0.0
        %710 = vmatpush.xpose.msra.mxu0 0.0
        %711 = vmatpush.xpose.msra.mxu0 0.0
        %712 = vmatpush.xpose.msra.mxu0 0.0
        %713 = vmatpush.xpose.msra.mxu0 0.0
        %714 = vmatpush.xpose.msra.mxu0 0.0
        %715 = vmatpush.xpose.msra.mxu0 0.0
        %716 = vmatpush.xpose.msra.mxu0 0.0
        %717 = vmatpush.xpose.msra.mxu0 0.0
        %718 = vmatpush.xpose.msra.mxu0 0.0
        %719 = vmatpush.xpose.msra.mxu0 0.0
        %720 = vmatpush.xpose.msra.mxu0 0.0
        %721 = vmatpush.xpose.msra.mxu0 0.0
        %722 = vmatpush.xpose.msra.mxu0 0.0
        %723 = vmatpush.xpose.msra.mxu0 %v706
        %724 = vmatmul.f32.gmra.mxu0 %v704
        %v725 = vpop.f32.mrf.mxu0
        %v726 = vadd.f32 0.0, %v725
        %727 = vdwg.mxu0
        %v728 = vmul.f32 %v726, 0.35355338
        %v729 = vsel %vm451, %v728, -inf
        %730 = vmax.xlane.f32.xlu0 %v729
        %v731 = vpop.xlane.xlu0 %730
        %v732 = vsub.f32 %v728, %v731
        %v733 = vmul.f32 %v732, 1.442695
        %v734 = vpow.pop %v733
        %v735 = vsel %vm451, %v734, 0.0
        %736 = vadd.xlane.f32.xlu0 %v735
        %v737 = vpop.xlane.xlu0 %736
        %v738 = vrcp.pop %v737
        %v739 = vmul.f32 %v737, %v738
        %v740 = vsub.f32 1.0, %v739
        %v741 = vmul.f32 %v738, %v740
        %v742 = vadd.f32 %v738, %v741
        %vm743 = vweird.f32 %v737
        %vm744 = vweird.f32 %v738
        %vm745 = vmor %vm743, %vm744
        %v746 = vsel %vm745, %v738, %v742
        %v747 = vand.u32 2147483647, %v737
        %vm748 = vcmp.eq.f32.partialorder %v747, 8.507059e+37
        %v749 = vand.u32 %v737, 2147483648
        %v750 = vor.u32 1.1754944e-38, %v749
        %v751 = vsel %vm748, %v750, %v746
        %v752 = vmul.f32 %v734, %v751
        %753 = vrot.lane.b32.xlu0 %v447, 40
        %v754 = vpop.permute.xlu0 %753
        %v757 = vsel %vm451, %v752, 0
        %759 = vmatpush.msra.mxu0 0.0
        %760 = vmatpush.msra.mxu0 0.0
        %761 = vmatpush.msra.mxu0 0.0
        %762 = vmatpush.msra.mxu0 0.0
        %763 = vmatpush.msra.mxu0 0.0
        %764 = vmatpush.msra.mxu0 0.0
        %765 = vmatpush.msra.mxu0 0.0
        %766 = vmatpush.msra.mxu0 0.0
        %767 = vmatpush.msra.mxu0 0.0
        %768 = vmatpush.msra.mxu0 0.0
        %769 = vmatpush.msra.mxu0 0.0
        %770 = vmatpush.msra.mxu0 0.0
        %771 = vmatpush.msra.mxu0 0.0
        %772 = vmatpush.msra.mxu0 0.0
        %773 = vmatpush.msra.mxu0 0.0
        %774 = vmatpush.msra.mxu0 %v754
        %775 = vmatmul.f32.gmra.mxu0 %v757
        %v776 = vpop.f32.mrf.mxu0
        %v777 = vadd.f32 0.0, %v776
        %778 = vdwg.mxu0
        %780 = vrot.lane.b32.xlu0 %v777, 24
        %v781 = vpop.permute.xlu0 %780
        %vm783 = vcmask 261312
        %784 = vst.msk [vmem:[#allocation2] sm:$0xff] %vm783, %v781
        %v785 = vld [vmem:[#allocation2] sm:$0xff]
        %v786 = vld [vmem:[%s4] sm:$0xff]
        %v787 = vld [vmem:[%s4 + $0x8] sm:$0xff]
        %v788 = vld [vmem:[%s4 + $0x10] sm:$0xff]
        %v789 = vld [vmem:[%s4 + $0x18] sm:$0xff]
        %v790 = vperm.slane %v404, 3
        %v792 = vsel %vm410, %v785, 0
        %794 = vmatpush.msra.mxu0 0.0
        %795 = vmatpush.msra.mxu0 0.0
        %796 = vmatpush.msra.mxu0 0.0
        %797 = vmatpush.msra.mxu0 0.0
        %798 = vmatpush.msra.mxu0 0.0
        %799 = vmatpush.msra.mxu0 0.0
        %800 = vmatpush.msra.mxu0 0.0
        %801 = vmatpush.msra.mxu0 0.0
        %802 = vmatpush.msra.mxu0 0.0
        %803 = vmatpush.msra.mxu0 0.0
        %804 = vmatpush.msra.mxu0 0.0
        %805 = vmatpush.msra.mxu0 0.0
        %806 = vmatpush.msra.mxu0 %v789
        %807 = vmatpush.msra.mxu0 %v788
        %808 = vmatpush.msra.mxu0 %v787
        %809 = vmatpush.msra.mxu0 %v786
        %810 = vmatmul.f32.gmra.mxu0 %v792
        %v811 = vpop.f32.mrf.mxu0
        %v812 = vadd.f32 %v790, %v811
        %813 = vdwg.mxu0
        %v814 = vadd.f32 %v403, %v812
        %v815 = vsel %vm410, %v814, 0.0
        %816 = vadd.xlane.f32.xlu0 %v815
        %v817 = vpop.xlane.xlu0 %816
        %v818 = vrcp.pop 32.0
        %v819 = vmul.f32 32.0, %v818
        %v820 = vsub.f32 1.0, %v819
        %v821 = vmul.f32 %v818, %v820
        %v822 = vadd.f32 %v818, %v821
        %vm823 = vweird.f32 %v818
        %v824 = vsel %vm823, %v818, %v822
        %v825 = vmul.f32 %v817, %v824
        %v826 = vsub.f32 %v814, %v825
        %v827 = vmul.f32 %v826, %v826
        %v828 = vsel %vm410, %v827, 0.0
        %829 = vadd.xlane.f32.xlu0 %v828
        %v830 = vpop.xlane.xlu0 %829
        %v831 = vmul.f32 %v830, %v824
        %v832 = vadd.f32 %v831, 1e-05
        %v833 = vrsqrt.pop %v832
        %v834 = vmul.f32 %v833, %v832
        %v835 = vmul.f32 %v834, %v833
        %v836 = vmul.f32 0.5, %v835
        %v837 = vsub.f32 1.5, %v836
        %v838 = vmul.f32 %v833, %v837
        %vm839 = vweird.f32 %v832
        %vm840 = vweird.f32 %v833
        %vm841 = vmor %vm839, %vm840
        %v842 = vsel %vm841, %v833, %v838
        %v843 = vmul.f32 %v826, %v842
        %v844 = vperm.slane %v404, 5
        %v845 = vmul.f32 %v843, %v844
        %v846 = vperm.slane %v404, 6
        %v847 = vadd.f32 %v845, %v846
        %v848 = vld [vmem:[%s5] sm:$0xff]
        %v849 = vld [vmem:[%s5 + $0x8] sm:$0xff]
        %v850 = vld [vmem:[%s5 + $0x10] sm:$0xff]
        %v851 = vld [vmem:[%s5 + $0x18] sm:$0xff]
        %v852 = vld [vmem:[%s6] sm:$0x1]
        %v854 = vperm.slane %v852, 0
        %v857 = vsel %vm410, %v847, 0
        %859 = vmatpush.msra.mxu0 0.0
        %860 = vmatpush.msra.mxu0 0.0
        %861 = vmatpush.msra.mxu0 0.0
        %862 = vmatpush.msra.mxu0 0.0
        %863 = vmatpush.msra.mxu0 0.0
        %864 = vmatpush.msra.mxu0 0.0
        %865 = vmatpush.msra.mxu0 0.0
        %866 = vmatpush.msra.mxu0 0.0
        %867 = vmatpush.msra.mxu0 0.0
        %868 = vmatpush.msra.mxu0 0.0
        %869 = vmatpush.msra.mxu0 0.0
        %870 = vmatpush.msra.mxu0 0.0
        %871 = vmatpush.msra.mxu0 %v851
        %872 = vmatpush.msra.mxu0 %v850
        %873 = vmatpush.msra.mxu0 %v849
        %874 = vmatpush.msra.mxu0 %v848
        %875 = vmatmul.f32.gmra.mxu0 %v857
        %v876 = vpop.f32.mrf.mxu0
        %v877 = vadd.f32 %v854, %v876
        %878 = vdwg.mxu0
        %v879 = vmul.f32 %v877, 0.5
        %v880 = vmul.f32 %v877, 0.70710677
        %v881 = vand.u32 2147483647, %v880
        %v882 = vmul.f32 %v881, 0.3275911
        %v883 = vadd.f32 %v882, 1.0
        %v884 = vrcp.pop %v883
        %v885 = vmul.f32 %v883, %v884
        %v886 = vsub.f32 1.0, %v885
        %v887 = vmul.f32 %v884, %v886
        %v888 = vadd.f32 %v884, %v887
        %vm889 = vweird.f32 %v883
        %vm890 = vweird.f32 %v884
        %vm891 = vmor %vm889, %vm890
        %v892 = vsel %vm891, %v884, %v888
        %v893 = vand.u32 2147483647, %v883
        %vm894 = vcmp.eq.f32.partialorder %v893, 8.507059e+37
        %v895 = vand.u32 %v883, 2147483648
        %v896 = vor.u32 1.1754944e-38, %v895
        %v897 = vsel %vm894, %v896, %v892
        %v898 = vmul.f32 1.0, %v897
        %v899 = vmul.f32 %v898, 1.0614054
        %v900 = vadd.f32 %v899, -1.4531521
        %v901 = vmul.f32 %v900, %v898
        %v902 = vadd.f32 %v901, 1.4214138
        %v903 = vmul.f32 %v902, %v898
        %v904 = vadd.f32 %v903, -0.28449672
        %v905 = vmul.f32 %v904, %v898
        %v906 = vadd.f32 %v905, 0.2548296
        %v907 = vmul.f32 %v906, %v898
        %v908 = vsub.f32 0.0, %v881
        %v909 = vmul.f32 %v908, %v881
        %v910 = vmul.f32 %v909, 1.442695
        %v911 = vpow.pop %v910
        %v912 = vmul.f32 %v907, %v911
        %v913 = vsub.f32 1.0, %v912
        %vm914 = vcmp.lt.f32.partialorder %v880, 0.0
        %v915 = vsub.f32 0.0, %v913
        %v916 = vsel %vm914, %v915, %v913
        %v917 = vadd.f32 %v916, 1.0
        %v918 = vmul.f32 %v879, %v917
        %v919 = vld [vmem:[%s7] sm:$0xff]
        %v920 = vld [vmem:[%s7 + $0x8] sm:$0xff]
        %v921 = vld [vmem:[%s7 + $0x10] sm:$0xff]
        %v922 = vld [vmem:[%s7 + $0x18] sm:$0xff]
        %v923 = vld [vmem:[%s7 + $0x20] sm:$0xff]
        %v924 = vld [vmem:[%s7 + $0x28] sm:$0xff]
        %v925 = vld [vmem:[%s7 + $0x30] sm:$0xff]
        %v926 = vld [vmem:[%s7 + $0x38] sm:$0xff]
        %v927 = vperm.slane %v404, 4
        %vm928 = vcmask 523264
        %v930 = vsel %vm928, %v918, 0
        %932 = vmatpush.msra.mxu0 0.0
        %933 = vmatpush.msra.mxu0 0.0
        %934 = vmatpush.msra.mxu0 0.0
        %935 = vmatpush.msra.mxu0 0.0
        %936 = vmatpush.msra.mxu0 0.0
        %937 = vmatpush.msra.mxu0 0.0
        %938 = vmatpush.msra.mxu0 0.0
        %939 = vmatpush.msra.mxu0 0.0
        %940 = vmatpush.msra.mxu0 %v926
        %941 = vmatpush.msra.mxu0 %v925
        %942 = vmatpush.msra.mxu0 %v924
        %943 = vmatpush.msra.mxu0 %v923
        %944 = vmatpush.msra.mxu0 %v922
        %945 = vmatpush.msra.mxu0 %v921
        %946 = vmatpush.msra.mxu0 %v920
        %947 = vmatpush.msra.mxu0 %v919
        %948 = vmatmul.f32.gmra.mxu0 %v930
        %v949 = vpop.f32.mrf.mxu0
        %v950 = vadd.f32 %v927, %v949
        %951 = vdwg.mxu0
        %v952 = vadd.f32 %v847, %v950
        %v953 = vsel %vm410, %v952, 0.0
        %954 = vadd.xlane.f32.xlu0 %v953
        %v955 = vpop.xlane.xlu0 %954
        %v956 = vmul.f32 %v955, %v824
        %v957 = vsub.f32 %v952, %v956
        %v958 = vmul.f32 %v957, %v957
        %v959 = vsel %vm410, %v958, 0.0
        %960 = vadd.xlane.f32.xlu0 %v959
        %v961 = vpop.xlane.xlu0 %960
        %v962 = vmul.f32 %v961, %v824
        %v963 = vadd.f32 %v962, 1e-05
        %v964 = vrsqrt.pop %v963
        %v965 = vmul.f32 %v964, %v963
        %v966 = vmul.f32 %v965, %v964
        %v967 = vmul.f32 0.5, %v966
        %v968 = vsub.f32 1.5, %v967
        %v969 = vmul.f32 %v964, %v968
        %vm970 = vweird.f32 %v963
        %vm971 = vweird.f32 %v964
        %vm972 = vmor %vm970, %vm971
        %v973 = vsel %vm972, %v964, %v969
        %v974 = vmul.f32 %v957, %v973
        %v975 = vperm.slane %v404, 7
        %v976 = vmul.f32 %v974, %v975
        %v977 = vperm.slane %v405, 0
        %v978 = vadd.f32 %v976, %v977
        %s979 = scalar_lea.vmem %s8, 16
        %v980 = vld [vmem:[%s979] sm:$0xff]
        %v981 = vld [vmem:[%s979 + $0x8] sm:$0x1]
        %s982 = scalar_lea.vmem %s3, 32
        %v983 = vld [vmem:[%s982] sm:$0xff]
        %v984 = vld [vmem:[%s982 + $0x8] sm:$0xff]
        %v985 = vld [vmem:[%s982 + $0x10] sm:$0xff]
        %v986 = vld [vmem:[%s982 + $0x18] sm:$0xff]
        %v988 = vsel %vm410, %v978, 0
        %990 = vmatpush.msra.mxu0 0.0
        %991 = vmatpush.msra.mxu0 0.0
        %992 = vmatpush.msra.mxu0 0.0
        %993 = vmatpush.msra.mxu0 0.0
        %994 = vmatpush.msra.mxu0 0.0
        %995 = vmatpush.msra.mxu0 0.0
        %996 = vmatpush.msra.mxu0 0.0
        %997 = vmatpush.msra.mxu0 0.0
        %998 = vmatpush.msra.mxu0 0.0
        %999 = vmatpush.msra.mxu0 0.0
        %1000 = vmatpush.msra.mxu0 0.0
        %1001 = vmatpush.msra.mxu0 0.0
        %1002 = vmatpush.msra.mxu0 %v986
        %1003 = vmatpush.msra.mxu0 %v985
        %1004 = vmatpush.msra.mxu0 %v984
        %1005 = vmatpush.msra.mxu0 %v983
        %1006 = vmatmul.f32.gmra.mxu0 %v988
        %v1007 = vpop.f32.mrf.mxu0
        %v1008 = vadd.f32 0.0, %v1007
        %1009 = vdwg.mxu0
        %v1010 = vperm.slane %v980, 0
        %v1011 = vadd.f32 %v1008, %v1010
        %v1012 = vperm.slane %v980, 1
        %1014 = vrot.lane.b32.xlu0 %v1012, 32
        %v1015 = vpop.permute.xlu0 %1014
        %v1017 = vadd.f32 %v1008, %v1015
        %v1018 = vperm.slane %v980, 2
        %1020 = vrot.lane.b32.xlu0 %v1018, 64
        %v1021 = vpop.permute.xlu0 %1020
        %v1023 = vadd.f32 %v1008, %v1021
        %1025 = vrot.lane.b32.xlu0 %v1017, 96
        %v1026 = vpop.permute.xlu0 %1025
        %v1028 = vsel %vm451, %v1011, 0
        %v1030 = vsel %vm451, %v1026, 0
        %1032 = vmatpush.xpose.msra.mxu0 0.0
        %1033 = vmatpush.xpose.msra.mxu0 0.0
        %1034 = vmatpush.xpose.msra.mxu0 0.0
        %1035 = vmatpush.xpose.msra.mxu0 0.0
        %1036 = vmatpush.xpose.msra.mxu0 0.0
        %1037 = vmatpush.xpose.msra.mxu0 0.0
        %1038 = vmatpush.xpose.msra.mxu0 0.0
        %1039 = vmatpush.xpose.msra.mxu0 0.0
        %1040 = vmatpush.xpose.msra.mxu0 0.0
        %1041 = vmatpush.xpose.msra.mxu0 0.0
        %1042 = vmatpush.xpose.msra.mxu0 0.0
        %1043 = vmatpush.xpose.msra.mxu0 0.0
        %1044 = vmatpush.xpose.msra.mxu0 0.0
        %1045 = vmatpush.xpose.msra.mxu0 0.0
        %1046 = vmatpush.xpose.msra.mxu0 0.0
        %1047 = vmatpush.xpose.msra.mxu0 %v1030
        %1048 = vmatmul.f32.gmra.mxu0 %v1028
        %v1049 = vpop.f32.mrf.mxu0
        %v1050 = vadd.f32 0.0, %v1049
        %1051 = vdwg.mxu0
        %v1052 = vmul.f32 %v1050, 0.35355338
        %v1053 = vsel %vm451, %v1052, -inf
        %1054 = vmax.xlane.f32.xlu0 %v1053
        %v1055 = vpop.xlane.xlu0 %1054
        %v1056 = vsub.f32 %v1052, %v1055
        %v1057 = vmul.f32 %v1056, 1.442695
        %v1058 = vpow.pop %v1057
        %v1059 = vsel %vm451, %v1058, 0.0
        %1060 = vadd.xlane.f32.xlu0 %v1059
        %v1061 = vpop.xlane.xlu0 %1060
        %v1062 = vrcp.pop %v1061
        %v1063 = vmul.f32 %v1061, %v1062
        %v1064 = vsub.f32 1.0, %v1063
        %v1065 = vmul.f32 %v1062, %v1064
        %v1066 = vadd.f32 %v1062, %v1065
        %vm1067 = vweird.f32 %v1061
        %vm1068 = vweird.f32 %v1062
        %vm1069 = vmor %vm1067, %vm1068
        %v1070 = vsel %vm1069, %v1062, %v1066
        %v1071 = vand.u32 2147483647, %v1061
        %vm1072 = vcmp.eq.f32.partialorder %v1071, 8.507059e+37
        %v1073 = vand.u32 %v1061, 2147483648
        %v1074 = vor.u32 1.1754944e-38, %v1073
        %v1075 = vsel %vm1072, %v1074, %v1070
        %v1076 = vmul.f32 %v1058, %v1075
        %1078 = vrot.lane.b32.xlu0 %v1023, 64
        %v1079 = vpop.permute.xlu0 %1078
        %v1082 = vsel %vm451, %v1076, 0
        %1084 = vmatpush.msra.mxu0 0.0
        %1085 = vmatpush.msra.mxu0 0.0
        %1086 = vmatpush.msra.mxu0 0.0
        %1087 = vmatpush.msra.mxu0 0.0
        %1088 = vmatpush.msra.mxu0 0.0
        %1089 = vmatpush.msra.mxu0 0.0
        %1090 = vmatpush.msra.mxu0 0.0
        %1091 = vmatpush.msra.mxu0 0.0
        %1092 = vmatpush.msra.mxu0 0.0
        %1093 = vmatpush.msra.mxu0 0.0
        %1094 = vmatpush.msra.mxu0 0.0
        %1095 = vmatpush.msra.mxu0 0.0
        %1096 = vmatpush.msra.mxu0 0.0
        %1097 = vmatpush.msra.mxu0 0.0
        %1098 = vmatpush.msra.mxu0 0.0
        %1099 = vmatpush.msra.mxu0 %v1079
        %1100 = vmatmul.f32.gmra.mxu0 %v1082
        %v1101 = vpop.f32.mrf.mxu0
        %v1102 = vadd.f32 0.0, %v1101
        %1103 = vdwg.mxu0
        %1104 = vst.msk [vmem:[#allocation2] sm:$0xff] %vm451, %v1102
        %1105 = vrot.lane.b32.xlu0 %v1011, 120
        %v1106 = vpop.permute.xlu0 %1105
        %1107 = vrot.lane.b32.xlu0 %v1017, 88
        %v1108 = vpop.permute.xlu0 %1107
        %v1109 = vsel %vm451, %v1106, 0
        %v1111 = vsel %vm451, %v1108, 0
        %1113 = vmatpush.xpose.msra.mxu0 0.0
        %1114 = vmatpush.xpose.msra.mxu0 0.0
        %1115 = vmatpush.xpose.msra.mxu0 0.0
        %1116 = vmatpush.xpose.msra.mxu0 0.0
        %1117 = vmatpush.xpose.msra.mxu0 0.0
        %1118 = vmatpush.xpose.msra.mxu0 0.0
        %1119 = vmatpush.xpose.msra.mxu0 0.0
        %1120 = vmatpush.xpose.msra.mxu0 0.0
        %1121 = vmatpush.xpose.msra.mxu0 0.0
        %1122 = vmatpush.xpose.msra.mxu0 0.0
        %1123 = vmatpush.xpose.msra.mxu0 0.0
        %1124 = vmatpush.xpose.msra.mxu0 0.0
        %1125 = vmatpush.xpose.msra.mxu0 0.0
        %1126 = vmatpush.xpose.msra.mxu0 0.0
        %1127 = vmatpush.xpose.msra.mxu0 0.0
        %1128 = vmatpush.xpose.msra.mxu0 %v1111
        %1129 = vmatmul.f32.gmra.mxu0 %v1109
        %v1130 = vpop.f32.mrf.mxu0
        %v1131 = vadd.f32 0.0, %v1130
        %1132 = vdwg.mxu0
        %v1133 = vmul.f32 %v1131, 0.35355338
        %v1134 = vsel %vm451, %v1133, -inf
        %1135 = vmax.xlane.f32.xlu0 %v1134
        %v1136 = vpop.xlane.xlu0 %1135
        %v1137 = vsub.f32 %v1133, %v1136
        %v1138 = vmul.f32 %v1137, 1.442695
        %v1139 = vpow.pop %v1138
        %v1140 = vsel %vm451, %v1139, 0.0
        %1141 = vadd.xlane.f32.xlu0 %v1140
        %v1142 = vpop.xlane.xlu0 %1141
        %v1143 = vrcp.pop %v1142
        %v1144 = vmul.f32 %v1142, %v1143
        %v1145 = vsub.f32 1.0, %v1144
        %v1146 = vmul.f32 %v1143, %v1145
        %v1147 = vadd.f32 %v1143, %v1146
        %vm1148 = vweird.f32 %v1142
        %vm1149 = vweird.f32 %v1143
        %vm1150 = vmor %vm1148, %vm1149
        %v1151 = vsel %vm1150, %v1143, %v1147
        %v1152 = vand.u32 2147483647, %v1142
        %vm1153 = vcmp.eq.f32.partialorder %v1152, 8.507059e+37
        %v1154 = vand.u32 %v1142, 2147483648
        %v1155 = vor.u32 1.1754944e-38, %v1154
        %v1156 = vsel %vm1153, %v1155, %v1151
        %v1157 = vmul.f32 %v1139, %v1156
        %1158 = vrot.lane.b32.xlu0 %v1023, 56
        %v1159 = vpop.permute.xlu0 %1158
        %v1162 = vsel %vm451, %v1157, 0
        %1164 = vmatpush.msra.mxu0 0.0
        %1165 = vmatpush.msra.mxu0 0.0
        %1166 = vmatpush.msra.mxu0 0.0
        %1167 = vmatpush.msra.mxu0 0.0
        %1168 = vmatpush.msra.mxu0 0.0
        %1169 = vmatpush.msra.mxu0 0.0
        %1170 = vmatpush.msra.mxu0 0.0
        %1171 = vmatpush.msra.mxu0 0.0
        %1172 = vmatpush.msra.mxu0 0.0
        %1173 = vmatpush.msra.mxu0 0.0
        %1174 = vmatpush.msra.mxu0 0.0
        %1175 = vmatpush.msra.mxu0 0.0
        %1176 = vmatpush.msra.mxu0 0.0
        %1177 = vmatpush.msra.mxu0 0.0
        %1178 = vmatpush.msra.mxu0 0.0
        %1179 = vmatpush.msra.mxu0 %v1159
        %1180 = vmatmul.f32.gmra.mxu0 %v1162
        %v1181 = vpop.f32.mrf.mxu0
        %v1182 = vadd.f32 0.0, %v1181
        %1183 = vdwg.mxu0
        %1185 = vrot.lane.b32.xlu0 %v1182, 8
        %v1186 = vpop.permute.xlu0 %1185
        %1188 = vst.msk [vmem:[#allocation2] sm:$0xff] %vm613, %v1186
        %1189 = vrot.lane.b32.xlu0 %v1011, 112
        %v1190 = vpop.permute.xlu0 %1189
        %1191 = vrot.lane.b32.xlu0 %v1017, 80
        %v1192 = vpop.permute.xlu0 %1191
        %v1193 = vsel %vm451, %v1190, 0
        %v1195 = vsel %vm451, %v1192, 0
        %1197 = vmatpush.xpose.msra.mxu0 0.0
        %1198 = vmatpush.xpose.msra.mxu0 0.0
        %1199 = vmatpush.xpose.msra.mxu0 0.0
        %1200 = vmatpush.xpose.msra.mxu0 0.0
        %1201 = vmatpush.xpose.msra.mxu0 0.0
        %1202 = vmatpush.xpose.msra.mxu0 0.0
        %1203 = vmatpush.xpose.msra.mxu0 0.0
        %1204 = vmatpush.xpose.msra.mxu0 0.0
        %1205 = vmatpush.xpose.msra.mxu0 0.0
        %1206 = vmatpush.xpose.msra.mxu0 0.0
        %1207 = vmatpush.xpose.msra.mxu0 0.0
        %1208 = vmatpush.xpose.msra.mxu0 0.0
        %1209 = vmatpush.xpose.msra.mxu0 0.0
        %1210 = vmatpush.xpose.msra.mxu0 0.0
        %1211 = vmatpush.xpose.msra.mxu0 0.0
        %1212 = vmatpush.xpose.msra.mxu0 %v1195
        %1213 = vmatmul.f32.gmra.mxu0 %v1193
        %v1214 = vpop.f32.mrf.mxu0
        %v1215 = vadd.f32 0.0, %v1214
        %1216 = vdwg.mxu0
        %v1217 = vmul.f32 %v1215, 0.35355338
        %v1218 = vsel %vm451, %v1217, -inf
        %1219 = vmax.xlane.f32.xlu0 %v1218
        %v1220 = vpop.xlane.xlu0 %1219
        %v1221 = vsub.f32 %v1217, %v1220
        %v1222 = vmul.f32 %v1221, 1.442695
        %v1223 = vpow.pop %v1222
        %v1224 = vsel %vm451, %v1223, 0.0
        %1225 = vadd.xlane.f32.xlu0 %v1224
        %v1226 = vpop.xlane.xlu0 %1225
        %v1227 = vrcp.pop %v1226
        %v1228 = vmul.f32 %v1226, %v1227
        %v1229 = vsub.f32 1.0, %v1228
        %v1230 = vmul.f32 %v1227, %v1229
        %v1231 = vadd.f32 %v1227, %v1230
        %vm1232 = vweird.f32 %v1226
        %vm1233 = vweird.f32 %v1227
        %vm1234 = vmor %vm1232, %vm1233
        %v1235 = vsel %vm1234, %v1227, %v1231
        %v1236 = vand.u32 2147483647, %v1226
        %vm1237 = vcmp.eq.f32.partialorder %v1236, 8.507059e+37
        %v1238 = vand.u32 %v1226, 2147483648
        %v1239 = vor.u32 1.1754944e-38, %v1238
        %v1240 = vsel %vm1237, %v1239, %v1235
        %v1241 = vmul.f32 %v1223, %v1240
        %1242 = vrot.lane.b32.xlu0 %v1023, 48
        %v1243 = vpop.permute.xlu0 %1242
        %v1246 = vsel %vm451, %v1241, 0
        %1248 = vmatpush.msra.mxu0 0.0
        %1249 = vmatpush.msra.mxu0 0.0
        %1250 = vmatpush.msra.mxu0 0.0
        %1251 = vmatpush.msra.mxu0 0.0
        %1252 = vmatpush.msra.mxu0 0.0
        %1253 = vmatpush.msra.mxu0 0.0
        %1254 = vmatpush.msra.mxu0 0.0
        %1255 = vmatpush.msra.mxu0 0.0
        %1256 = vmatpush.msra.mxu0 0.0
        %1257 = vmatpush.msra.mxu0 0.0
        %1258 = vmatpush.msra.mxu0 0.0
        %1259 = vmatpush.msra.mxu0 0.0
        %1260 = vmatpush.msra.mxu0 0.0
        %1261 = vmatpush.msra.mxu0 0.0
        %1262 = vmatpush.msra.mxu0 0.0
        %1263 = vmatpush.msra.mxu0 %v1243
        %1264 = vmatmul.f32.gmra.mxu0 %v1246
        %v1265 = vpop.f32.mrf.mxu0
        %v1266 = vadd.f32 0.0, %v1265
        %1267 = vdwg.mxu0
        %1269 = vrot.lane.b32.xlu0 %v1266, 16
        %v1270 = vpop.permute.xlu0 %1269
        %1272 = vst.msk [vmem:[#allocation2] sm:$0xff] %vm698, %v1270
        %1273 = vrot.lane.b32.xlu0 %v1011, 104
        %v1274 = vpop.permute.xlu0 %1273
        %1275 = vrot.lane.b32.xlu0 %v1017, 72
        %v1276 = vpop.permute.xlu0 %1275
        %v1277 = vsel %vm451, %v1274, 0
        %v1279 = vsel %vm451, %v1276, 0
        %1281 = vmatpush.xpose.msra.mxu0 0.0
        %1282 = vmatpush.xpose.msra.mxu0 0.0
        %1283 = vmatpush.xpose.msra.mxu0 0.0
        %1284 = vmatpush.xpose.msra.mxu0 0.0
        %1285 = vmatpush.xpose.msra.mxu0 0.0
        %1286 = vmatpush.xpose.msra.mxu0 0.0
        %1287 = vmatpush.xpose.msra.mxu0 0.0
        %1288 = vmatpush.xpose.msra.mxu0 0.0
        %1289 = vmatpush.xpose.msra.mxu0 0.0
        %1290 = vmatpush.xpose.msra.mxu0 0.0
        %1291 = vmatpush.xpose.msra.mxu0 0.0
        %1292 = vmatpush.xpose.msra.mxu0 0.0
        %1293 = vmatpush.xpose.msra.mxu0 0.0
        %1294 = vmatpush.xpose.msra.mxu0 0.0
        %1295 = vmatpush.xpose.msra.mxu0 0.0
        %1296 = vmatpush.xpose.msra.mxu0 %v1279
        %1297 = vmatmul.f32.gmra.mxu0 %v1277
        %v1298 = vpop.f32.mrf.mxu0
        %v1299 = vadd.f32 0.0, %v1298
        %1300 = vdwg.mxu0
        %v1301 = vmul.f32 %v1299, 0.35355338
        %v1302 = vsel %vm451, %v1301, -inf
        %1303 = vmax.xlane.f32.xlu0 %v1302
        %v1304 = vpop.xlane.xlu0 %1303
        %v1305 = vsub.f32 %v1301, %v1304
        %v1306 = vmul.f32 %v1305, 1.442695
        %v1307 = vpow.pop %v1306
        %v1308 = vsel %vm451, %v1307, 0.0
        %1309 = vadd.xlane.f32.xlu0 %v1308
        %v1310 = vpop.xlane.xlu0 %1309
        %v1311 = vrcp.pop %v1310
        %v1312 = vmul.f32 %v1310, %v1311
        %v1313 = vsub.f32 1.0, %v1312
        %v1314 = vmul.f32 %v1311, %v1313
        %v1315 = vadd.f32 %v1311, %v1314
        %vm1316 = vweird.f32 %v1310
        %vm1317 = vweird.f32 %v1311
        %vm1318 = vmor %vm1316, %vm1317
        %v1319 = vsel %vm1318, %v1311, %v1315
        %v1320 = vand.u32 2147483647, %v1310
        %vm1321 = vcmp.eq.f32.partialorder %v1320, 8.507059e+37
        %v1322 = vand.u32 %v1310, 2147483648
        %v1323 = vor.u32 1.1754944e-38, %v1322
        %v1324 = vsel %vm1321, %v1323, %v1319
        %v1325 = vmul.f32 %v1307, %v1324
        %1326 = vrot.lane.b32.xlu0 %v1023, 40
        %v1327 = vpop.permute.xlu0 %1326
        %v1330 = vsel %vm451, %v1325, 0
        %1332 = vmatpush.msra.mxu0 0.0
        %1333 = vmatpush.msra.mxu0 0.0
        %1334 = vmatpush.msra.mxu0 0.0
        %1335 = vmatpush.msra.mxu0 0.0
        %1336 = vmatpush.msra.mxu0 0.0
        %1337 = vmatpush.msra.mxu0 0.0
        %1338 = vmatpush.msra.mxu0 0.0
        %1339 = vmatpush.msra.mxu0 0.0
        %1340 = vmatpush.msra.mxu0 0.0
        %1341 = vmatpush.msra.mxu0 0.0
        %1342 = vmatpush.msra.mxu0 0.0
        %1343 = vmatpush.msra.mxu0 0.0
        %1344 = vmatpush.msra.mxu0 0.0
        %1345 = vmatpush.msra.mxu0 0.0
        %1346 = vmatpush.msra.mxu0 0.0
        %1347 = vmatpush.msra.mxu0 %v1327
        %1348 = vmatmul.f32.gmra.mxu0 %v1330
        %v1349 = vpop.f32.mrf.mxu0
        %v1350 = vadd.f32 0.0, %v1349
        %1351 = vdwg.mxu0
        %1353 = vrot.lane.b32.xlu0 %v1350, 24
        %v1354 = vpop.permute.xlu0 %1353
        %1356 = vst.msk [vmem:[#allocation2] sm:$0xff] %vm783, %v1354
        %v1357 = vld [vmem:[#allocation2] sm:$0xff]
        %s1358 = scalar_lea.vmem %s4, 32
        %v1359 = vld [vmem:[%s1358] sm:$0xff]
        %v1360 = vld [vmem:[%s1358 + $0x8] sm:$0xff]
        %v1361 = vld [vmem:[%s1358 + $0x10] sm:$0xff]
        %v1362 = vld [vmem:[%s1358 + $0x18] sm:$0xff]
        %v1363 = vperm.slane %v980, 3
        %v1365 = vsel %vm410, %v1357, 0
        %1367 = vmatpush.msra.mxu0 0.0
        %1368 = vmatpush.msra.mxu0 0.0
        %1369 = vmatpush.msra.mxu0 0.0
        %1370 = vmatpush.msra.mxu0 0.0
        %1371 = vmatpush.msra.mxu0 0.0
        %1372 = vmatpush.msra.mxu0 0.0
        %1373 = vmatpush.msra.mxu0 0.0
        %1374 = vmatpush.msra.mxu0 0.0
        %1375 = vmatpush.msra.mxu0 0.0
        %1376 = vmatpush.msra.mxu0 0.0
        %1377 = vmatpush.msra.mxu0 0.0
        %1378 = vmatpush.msra.mxu0 0.0
        %1379 = vmatpush.msra.mxu0 %v1362
        %1380 = vmatpush.msra.mxu0 %v1361
        %1381 = vmatpush.msra.mxu0 %v1360
        %1382 = vmatpush.msra.mxu0 %v1359
        %1383 = vmatmul.f32.gmra.mxu0 %v1365
        %v1384 = vpop.f32.mrf.mxu0
        %v1385 = vadd.f32 %v1363, %v1384
        %1386 = vdwg.mxu0
        %v1387 = vadd.f32 %v978, %v1385
        %v1388 = vsel %vm410, %v1387, 0.0
        %1389 = vadd.xlane.f32.xlu0 %v1388
        %v1390 = vpop.xlane.xlu0 %1389
        %v1391 = vmul.f32 %v1390, %v824
        %v1392 = vsub.f32 %v1387, %v1391
        %v1393 = vmul.f32 %v1392, %v1392
        %v1394 = vsel %vm410, %v1393, 0.0
        %1395 = vadd.xlane.f32.xlu0 %v1394
        %v1396 = vpop.xlane.xlu0 %1395
        %v1397 = vmul.f32 %v1396, %v824
        %v1398 = vadd.f32 %v1397, 1e-05
        %v1399 = vrsqrt.pop %v1398
        %v1400 = vmul.f32 %v1399, %v1398
        %v1401 = vmul.f32 %v1400, %v1399
        %v1402 = vmul.f32 0.5, %v1401
        %v1403 = vsub.f32 1.5, %v1402
        %v1404 = vmul.f32 %v1399, %v1403
        %vm1405 = vweird.f32 %v1398
        %vm1406 = vweird.f32 %v1399
        %vm1407 = vmor %vm1405, %vm1406
        %v1408 = vsel %vm1407, %v1399, %v1404
        %v1409 = vmul.f32 %v1392, %v1408
        %v1410 = vperm.slane %v980, 5
        %v1411 = vmul.f32 %v1409, %v1410
        %v1412 = vperm.slane %v980, 6
        %v1413 = vadd.f32 %v1411, %v1412
        %s1414 = scalar_lea.vmem %s5, 32
        %v1415 = vld [vmem:[%s1414] sm:$0xff]
        %v1416 = vld [vmem:[%s1414 + $0x8] sm:$0xff]
        %v1417 = vld [vmem:[%s1414 + $0x10] sm:$0xff]
        %v1418 = vld [vmem:[%s1414 + $0x18] sm:$0xff]
        %s1419 = scalar_lea.vmem %s6, 1
        %v1420 = vld [vmem:[%s1419] sm:$0x1]
        %v1422 = vperm.slane %v1420, 0
        %v1425 = vsel %vm410, %v1413, 0
        %1427 = vmatpush.msra.mxu0 0.0
        %1428 = vmatpush.msra.mxu0 0.0
        %1429 = vmatpush.msra.mxu0 0.0
        %1430 = vmatpush.msra.mxu0 0.0
        %1431 = vmatpush.msra.mxu0 0.0
        %1432 = vmatpush.msra.mxu0 0.0
        %1433 = vmatpush.msra.mxu0 0.0
        %1434 = vmatpush.msra.mxu0 0.0
        %1435 = vmatpush.msra.mxu0 0.0
        %1436 = vmatpush.msra.mxu0 0.0
        %1437 = vmatpush.msra.mxu0 0.0
        %1438 = vmatpush.msra.mxu0 0.0
        %1439 = vmatpush.msra.mxu0 %v1418
        %1440 = vmatpush.msra.mxu0 %v1417
        %1441 = vmatpush.msra.mxu0 %v1416
        %1442 = vmatpush.msra.mxu0 %v1415
        %1443 = vmatmul.f32.gmra.mxu0 %v1425
        %v1444 = vpop.f32.mrf.mxu0
        %v1445 = vadd.f32 %v1422, %v1444
        %1446 = vdwg.mxu0
        %v1447 = vmul.f32 %v1445, 0.5
        %v1448 = vmul.f32 %v1445, 0.70710677
        %v1449 = vand.u32 2147483647, %v1448
        %v1450 = vmul.f32 %v1449, 0.3275911
        %v1451 = vadd.f32 %v1450, 1.0
        %v1452 = vrcp.pop %v1451
        %v1453 = vmul.f32 %v1451, %v1452
        %v1454 = vsub.f32 1.0, %v1453
        %v1455 = vmul.f32 %v1452, %v1454
        %v1456 = vadd.f32 %v1452, %v1455
        %vm1457 = vweird.f32 %v1451
        %vm1458 = vweird.f32 %v1452
        %vm1459 = vmor %vm1457, %vm1458
        %v1460 = vsel %vm1459, %v1452, %v1456
        %v1461 = vand.u32 2147483647, %v1451
        %vm1462 = vcmp.eq.f32.partialorder %v1461, 8.507059e+37
        %v1463 = vand.u32 %v1451, 2147483648
        %v1464 = vor.u32 1.1754944e-38, %v1463
        %v1465 = vsel %vm1462, %v1464, %v1460
        %v1466 = vmul.f32 1.0, %v1465
        %v1467 = vmul.f32 %v1466, 1.0614054
        %v1468 = vadd.f32 %v1467, -1.4531521
        %v1469 = vmul.f32 %v1468, %v1466
        %v1470 = vadd.f32 %v1469, 1.4214138
        %v1471 = vmul.f32 %v1470, %v1466
        %v1472 = vadd.f32 %v1471, -0.28449672
        %v1473 = vmul.f32 %v1472, %v1466
        %v1474 = vadd.f32 %v1473, 0.2548296
        %v1475 = vmul.f32 %v1474, %v1466
        %v1476 = vsub.f32 0.0, %v1449
        %v1477 = vmul.f32 %v1476, %v1449
        %v1478 = vmul.f32 %v1477, 1.442695
        %v1479 = vpow.pop %v1478
        %v1480 = vmul.f32 %v1475, %v1479
        %v1481 = vsub.f32 1.0, %v1480
        %vm1482 = vcmp.lt.f32.partialorder %v1448, 0.0
        %v1483 = vsub.f32 0.0, %v1481
        %v1484 = vsel %vm1482, %v1483, %v1481
        %v1485 = vadd.f32 %v1484, 1.0
        %v1486 = vmul.f32 %v1447, %v1485
        %s1487 = scalar_lea.vmem %s7, 64
        %v1488 = vld [vmem:[%s1487] sm:$0xff]
        %v1489 = vld [vmem:[%s1487 + $0x8] sm:$0xff]
        %v1490 = vld [vmem:[%s1487 + $0x10] sm:$0xff]
        %v1491 = vld [vmem:[%s1487 + $0x18] sm:$0xff]
        %v1492 = vld [vmem:[%s1487 + $0x20] sm:$0xff]
        %v1493 = vld [vmem:[%s1487 + $0x28] sm:$0xff]
        %v1494 = vld [vmem:[%s1487 + $0x30] sm:$0xff]
        %v1495 = vld [vmem:[%s1487 + $0x38] sm:$0xff]
        %v1496 = vperm.slane %v980, 4
        %v1498 = vsel %vm928, %v1486, 0
        %1500 = vmatpush.msra.mxu0 0.0
        %1501 = vmatpush.msra.mxu0 0.0
        %1502 = vmatpush.msra.mxu0 0.0
        %1503 = vmatpush.msra.mxu0 0.0
        %1504 = vmatpush.msra.mxu0 0.0
        %1505 = vmatpush.msra.mxu0 0.0
        %1506 = vmatpush.msra.mxu0 0.0
        %1507 = vmatpush.msra.mxu0 0.0
        %1508 = vmatpush.msra.mxu0 %v1495
        %1509 = vmatpush.msra.mxu0 %v1494
        %1510 = vmatpush.msra.mxu0 %v1493
        %1511 = vmatpush.msra.mxu0 %v1492
        %1512 = vmatpush.msra.mxu0 %v1491
        %1513 = vmatpush.msra.mxu0 %v1490
        %1514 = vmatpush.msra.mxu0 %v1489
        %1515 = vmatpush.msra.mxu0 %v1488
        %1516 = vmatmul.f32.gmra.mxu0 %v1498
        %v1517 = vpop.f32.mrf.mxu0
        %v1518 = vadd.f32 %v1496, %v1517
        %1519 = vdwg.mxu0
        %v1520 = vadd.f32 %v1413, %v1518
        %v1521 = vsel %vm410, %v1520, 0.0
        %1522 = vadd.xlane.f32.xlu0 %v1521
        %v1523 = vpop.xlane.xlu0 %1522
        %v1524 = vmul.f32 %v1523, %v824
        %v1525 = vsub.f32 %v1520, %v1524
        %v1526 = vmul.f32 %v1525, %v1525
        %v1527 = vsel %vm410, %v1526, 0.0
        %1528 = vadd.xlane.f32.xlu0 %v1527
        %v1529 = vpop.xlane.xlu0 %1528
        %v1530 = vmul.f32 %v1529, %v824
        %v1531 = vadd.f32 %v1530, 1e-05
        %v1532 = vrsqrt.pop %v1531
        %v1533 = vmul.f32 %v1532, %v1531
        %v1534 = vmul.f32 %v1533, %v1532
        %v1535 = vmul.f32 0.5, %v1534
        %v1536 = vsub.f32 1.5, %v1535
        %v1537 = vmul.f32 %v1532, %v1536
        %vm1538 = vweird.f32 %v1531
        %vm1539 = vweird.f32 %v1532
        %vm1540 = vmor %vm1538, %vm1539
        %v1541 = vsel %vm1540, %v1532, %v1537
        %v1542 = vmul.f32 %v1525, %v1541
        %v1543 = vperm.slane %v980, 7
        %v1544 = vmul.f32 %v1542, %v1543
        %v1545 = vperm.slane %v981, 0
        %v1546 = vadd.f32 %v1544, %v1545
        %v1547 = vld [vmem:[%s9] sm:$0x3]
        %v1548 = vsel %vm410, %v1546, 0.0
        %1549 = vadd.xlane.f32.xlu0 %v1548
        %v1550 = vpop.xlane.xlu0 %1549
        %v1551 = vmul.f32 %v1550, %v824
        %v1552 = vsub.f32 %v1546, %v1551
        %v1553 = vmul.f32 %v1552, %v1552
        %v1554 = vsel %vm410, %v1553, 0.0
        %1555 = vadd.xlane.f32.xlu0 %v1554
        %v1556 = vpop.xlane.xlu0 %1555
        %v1557 = vmul.f32 %v1556, %v824
        %v1558 = vadd.f32 %v1557, 1e-05
        %v1559 = vrsqrt.pop %v1558
        %v1560 = vmul.f32 %v1559, %v1558
        %v1561 = vmul.f32 %v1560, %v1559
        %v1562 = vmul.f32 0.5, %v1561
        %v1563 = vsub.f32 1.5, %v1562
        %v1564 = vmul.f32 %v1559, %v1563
        %vm1565 = vweird.f32 %v1558
        %vm1566 = vweird.f32 %v1559
        %vm1567 = vmor %vm1565, %vm1566
        %v1568 = vsel %vm1567, %v1559, %v1564
        %v1569 = vmul.f32 %v1552, %v1568
        %v1570 = vperm.slane %v1547, 0
        %v1571 = vmul.f32 %v1569, %v1570
        %v1572 = vperm.slane %v1547, 1
        %v1573 = vadd.f32 %v1571, %v1572
        %1574 = vst.msk [vmem:[%s389] sm:$0xff] %vm410, %v1573
        %s1575 = sand.u32 %s255, 1
        %s1576 = scalar_lea.sflag [#allocation5], %s1575
        %s1577 = sand.u32 %s255, 1
        %s1578 = smul.addr %s1577, 8
        %s1579 = scalar_lea.vmem [#allocation6], %s1578
        // Predicated region
        $region65: #{tpu_custom_call.1} parent=59 // pred_check
          %p1580 = pneg %p265
        $region66: #{tpu_custom_call.1} parent=59 // pred_check_branch
          %1582 = sbr.rel (%p1580) target = $region68
        $region67: #{tpu_custom_call.1} parent=59 // pred_region
          %1584 = vsyncadd %s1576, 0
          %s1585 = smul.addr %s27, 8
          %s1586 = scalar_lea.hbm %s10, %s1585
          %s1588 = sshll.u32 %s1579, 4
          %s1589 = int_to_ptr.vmem [resolvable:$true] %s1588
          %s1590 = sshll.u32 %s1586, 4
          %s1591 = int_to_ptr.hbm [resolvable:$true] %s1590
          %1593 = dma.vmem_to_hbm [thread:$0]  %s1589, 128, %s1591, %s1576
        $region68: #{tpu_custom_call.1} parent=59 // pred_fallthru
          _
      $region60: #{tpu_custom_call.1} parent=5 // pred_fallthru
        _
      %p1594 = scmp.le.s32.totalorder 2, %s22
      // Predicated region
      $region69: #{tpu_custom_call.1} parent=5 // pred_check
        %p1595 = pneg %p1594
      $region70: #{tpu_custom_call.1} parent=5 // pred_check_branch
        %1597 = sbr.rel (%p1595) target = $region72
      $region71: #{tpu_custom_call.1} parent=5 // pred_region
        %s1598 = ssub.s32 %s22, 2
        // Predicated region
        $region73: #{tpu_custom_call.1} parent=71 // pred_check
          %p1599 = pneg %p271
        $region74: #{tpu_custom_call.1} parent=71 // pred_check_branch
          %1601 = sbr.rel (%p1599) target = $region76
        $region75: #{tpu_custom_call.1} parent=71 // pred_region
          %s1602 = sand.u32 %s256, 1
          %s1603 = scalar_lea.sflag [#allocation5], %s1602
          %s1604 = sand.u32 %s256, 1
          %s1605 = smul.addr %s1604, 8
          %s1606 = scalar_lea.vmem [#allocation6], %s1605
          %1608 = dma.done %s1603, 128
        $region76: #{tpu_custom_call.1} parent=71 // pred_fallthru
          _
      $region72: #{tpu_custom_call.1} parent=5 // pred_fallthru
        _
    $region6: #{tpu_custom_call.1} parent=1 // loop_footer
      %s26 = sadd.s32 1, %s22
    $region7: #{tpu_custom_call.1} parent=1 // loop_footer_branch
      %21 = sbr.rel target = $region3
    $region8: #{tpu_custom_call.1} parent=1 // loop_exit
      _
    %1609 = vsyncpa [#allocation4], 1
    %s1610 = scalar_lea.sflag [#allocation4], 1
    %1611 = vsyncpa %s1610, 1
    %1612 = vsyncpa [#allocation5], 1
    %s1613 = scalar_lea.sflag [#allocation5], 1
    %1614 = vsyncpa %s1613, 1

</llo_original>
